<compile_context>
chip_gen: v5e
topology: v5e:2x2
jax: 0.10.0
libtpu: 0.0.40
codegen_flags: <defaults>
</compile_context>

<pallas_src>
import jax
import jax.numpy as jnp
from jax import lax
from jax.experimental import pallas as pl
from jax.experimental.pallas import tpu as pltpu

EPS = 1e-5


def _round_up(x, m):
    return (x + m - 1) // m * m


# ----------------------------------------------------------------------------
# Pallas kernel (one image per grid step)
# ----------------------------------------------------------------------------
def _make_block_kernel(Cp, Wp, M2, M3, Mh):
    def kernel(p_ref, w1_ref, w2_ref, wr_ref, b1_ref, b2_ref, mask_ref,
               out_ref, h_ref):
        # scratch tail (covers the largest shifted conv2 read) — zero it once
        @pl.when(pl.program_id(0) == 0)
        def _():
            h_ref[M2:Mh, :] = jnp.zeros((Mh - M2, Cp), jnp.bfloat16)

        # ---- conv1 (+ folded BN1 scale) + bias + ReLU : one wide-K matmul ----
        acc1 = jnp.dot(p_ref[...], w1_ref[...],
                       preferred_element_type=jnp.float32)          # (M2, Cp)
        h1 = jnp.maximum(acc1 + b1_ref[...], 0.0)
        # zero the conv2 halo (border rows/cols of the padded h1 grid)
        h1 = h1 * mask_ref[...]                                      # (M2,1) bcast
        h_ref[0:M2, :] = h1.astype(jnp.bfloat16)

        # ---- conv2 (+ folded BN2 scale): 9 shifted-row matmuls, K = Cp ----
        # output row r = i*Wp + j  needs h1_padded rows r + kh*Wp + kw.
        acc2 = jnp.dot(h_ref[0:M3, :], w2_ref[0],
                       preferred_element_type=jnp.float32)           # (M3, Cp)
        for kh in range(3):
            for kw in range(3):
                if kh == 0 and kw == 0:
                    continue
                off = kh * Wp + kw
                acc2 = acc2 + jnp.dot(h_ref[off:off + M3, :],
                                      w2_ref[kh * 3 + kw],
                                      preferred_element_type=jnp.float32)

        # ---- residual: 1x1 conv (identity eye or folded downsample+BN).
        #      wr is (9*Cin, Cp), zero outside the centre-tap rows, so the
        #      full-width dot equals the centre-tap 1x1 conv (no narrow,
        #      lane-unaligned column slice needed). ----
        res = jnp.dot(p_ref[Wp + 1:Wp + 1 + M3, :], wr_ref[...],
                      preferred_element_type=jnp.float32)            # (M3, Cp)

        # bias b2 already includes the residual-BN shift
        out_ref[...] = jnp.maximum(acc2 + res + b2_ref[...], 0.0)

    return kernel


# ----------------------------------------------------------------------------
# Wrapper: layout plumbing, im2col over the padded grid, BN folding
# ----------------------------------------------------------------------------
def normal_rm_basic_block_forward(x_nchw, params, stride):
    x = jnp.transpose(x_nchw, (0, 2, 3, 1)).astype(jnp.float32)   # NCHW -> NHWC
    N, H, W, Cin = x.shape
    Cout = params['w1'].shape[0]
    has_downsample = (stride != 1) or (Cin != Cout)

    Ho = (H + 2 - 3) // stride + 1
    Wo = (W + 2 - 3) // stride + 1
    Hp, Wp = Ho + 2, Wo + 2
    M2 = Hp * Wp            # flattened padded h1 grid
    M3 = Ho * Wp            # conv2 output rows (last 2 cols of each row = junk)
    Mh = M2 + 2             # scratch rows (covers the largest shifted read)
    Cp = _round_up(Cout, 128)   # lane-dense channel count
    K1 = 9 * Cin

    # --- im2col for conv1, built over the PADDED h1 grid (border rows zero) --
    xp = jnp.pad(x, ((0, 0), (1, 1), (1, 1), (0, 0)))
    cols = []
    for kh in range(3):
        for kw in range(3):
            cols.append(xp[:, kh:kh + (Ho - 1) * stride + 1:stride,
                              kw:kw + (Wo - 1) * stride + 1:stride, :])
    patches = jnp.concatenate(cols, axis=-1)                       # (N,Ho,Wo,9Cin)
    patches = jnp.pad(patches, ((0, 0), (1, 1), (1, 1), (0, 0)))   # (N,Hp,Wp,9Cin)
    patches = patches.reshape(N, M2, K1).astype(jnp.bfloat16)

    # --- fold eval-mode BN into weights (scale) + per-channel bias -----------
    def fold(gamma, beta, mean, var):
        s = gamma / jnp.sqrt(var + EPS)
        return s, beta - mean * s

    s1, t1 = fold(*params['bn1'])
    s2, t2 = fold(*params['bn2'])

    w1 = jnp.transpose(params['w1'], (2, 3, 1, 0)).reshape(K1, Cout) * s1[None, :]
    w1 = jnp.pad(w1, ((0, 0), (0, Cp - Cout))).astype(jnp.bfloat16)
    b1 = jnp.pad(t1, (0, Cp - Cout)).reshape(1, Cp).astype(jnp.float32)

    w2 = jnp.transpose(params['w2'], (2, 3, 1, 0)) * s2[None, None, None, :]
    w2 = w2.reshape(9, Cout, Cout)
    w2 = jnp.pad(w2, ((0, 0), (0, Cp - Cout), (0, Cp - Cout))).astype(jnp.bfloat16)

    # residual 1x1 weight, embedded at the centre-tap rows of a (K1, Cp) matrix
    if has_downsample:
        sd, td = fold(*params['bnd'])
        wres_small = jnp.transpose(params['wd'][:, :, 0, 0], (1, 0)) * sd[None, :]
        bres = td
    else:
        wres_small = jnp.eye(Cin, Cout, dtype=jnp.float32)   # identity shortcut
        bres = jnp.zeros((Cout,), jnp.float32)
    wres_small = jnp.pad(wres_small, ((0, 0), (0, Cp - Cout)))
    wres = jnp.zeros((K1, Cp), jnp.float32).at[4 * Cin:5 * Cin, :].set(wres_small)
    wres = wres.astype(jnp.bfloat16)
    b2 = jnp.pad(t2 + bres, (0, Cp - Cout)).reshape(1, Cp).astype(jnp.float32)

    # interior mask on the padded h1 grid (zero halo for conv2)
    ip = jnp.arange(Hp)
    jp = jnp.arange(Wp)
    mask = ((ip[:, None] >= 1) & (ip[:, None] <= Ho) &
            (jp[None, :] >= 1) & (jp[None, :] <= Wo)).astype(jnp.float32)
    mask = mask.reshape(M2, 1)

    kernel = _make_block_kernel(Cp, Wp, M2, M3, Mh)

    out = pl.pallas_call(
        kernel,
        out_shape=jax.ShapeDtypeStruct((N, M3, Cp), jnp.float32),
        grid=(N,),
        in_specs=[
            pl.BlockSpec((None, M2, K1), lambda n: (n, 0, 0)),   # patches (per image)
            pl.BlockSpec((K1, Cp), lambda n: (0, 0)),            # w1 (resident)
            pl.BlockSpec((9, Cp, Cp), lambda n: (0, 0, 0)),      # w2 (resident)
            pl.BlockSpec((K1, Cp), lambda n: (0, 0)),            # wres (resident)
            pl.BlockSpec((1, Cp), lambda n: (0, 0)),             # b1
            pl.BlockSpec((1, Cp), lambda n: (0, 0)),             # b2 (+res bias)
            pl.BlockSpec((M2, 1), lambda n: (0, 0)),             # halo mask
        ],
        out_specs=pl.BlockSpec((None, M3, Cp), lambda n: (n, 0, 0)),
        scratch_shapes=[pltpu.VMEM((Mh, Cp), jnp.bfloat16)],     # padded h1
        compiler_params=pltpu.CompilerParams(
            dimension_semantics=("parallel",),
            vmem_limit_bytes=48 * 1024 * 1024,   # fits v7x's 64 MiB VMEM
        ),
    )(patches, w1, w2, wres, b1, b2, mask)

    # drop the 2 junk columns per row and the channel padding, back to NCHW
    out = out.reshape(N, Ho, Wp, Cp)[:, :, :Wo, :Cout]
    return jnp.transpose(out, (0, 3, 1, 2))


# ----------------------------------------------------------------------------
# Pure-JAX reference (semantics of the PyTorch forward, eval-mode BN)
# ----------------------------------------------------------------------------
def reference_forward(x_nchw, params, stride):
    x = jnp.transpose(x_nchw, (0, 2, 3, 1)).astype(jnp.float32)

    def conv(h, w_oihw, s, pad):
        w = jnp.transpose(w_oihw, (2, 3, 1, 0))  # OIHW -> HWIO
        return lax.conv_general_dilated(
            h, w, (s, s), ((pad, pad), (pad, pad)),
            dimension_numbers=('NHWC', 'HWIO', 'NHWC'),
            precision=lax.Precision.HIGHEST)

    def bn(h, gamma, beta, mean, var):
        return (h - mean) / jnp.sqrt(var + EPS) * gamma + beta

    inplanes = x_nchw.shape[1]
    planes = params['w1'].shape[0]
    has_downsample = (stride != 1) or (inplanes != planes)

    residual = x
    h = conv(x, params['w1'], stride, 1)
    h = bn(h, *params['bn1'])
    h = jnp.maximum(h, 0.0)
    h = conv(h, params['w2'], 1, 1)
    h = bn(h, *params['bn2'])
    if has_downsample:
        residual = conv(x, params['wd'], stride, 0)
        residual = bn(residual, *params['bnd'])
    out = jnp.maximum(h + residual, 0.0)
    return jnp.transpose(out, (0, 3, 1, 2))


# ----------------------------------------------------------------------------
# Deterministic parameter init (shapes from the module's __init__)
# ----------------------------------------------------------------------------
def init_params(key, inplanes, planes, stride):
    ks = jax.random.split(key, 6)

    def bf16_exact(a):   # keep test weights exactly bf16-representable
        return a.astype(jnp.bfloat16).astype(jnp.float32)

    def bn_params(k, c):
        k1, k2, k3, k4 = jax.random.split(k, 4)
        gamma = jax.random.uniform(k1, (c,), jnp.float32, 0.5, 1.5)
        beta = jax.random.normal(k2, (c,), jnp.float32) * 0.1
        mean = jax.random.normal(k3, (c,), jnp.float32) * 0.1
        var = jax.random.uniform(k4, (c,), jnp.float32, 0.5, 1.5)
        return (gamma, beta, mean, var)

    params = {
        'w1': bf16_exact(jax.random.normal(ks[0], (planes, inplanes, 3, 3),
                                           jnp.float32) * 0.2),
        'w2': bf16_exact(jax.random.normal(ks[1], (planes, planes, 3, 3),
                                           jnp.float32) * 0.2),
        'bn1': bn_params(ks[2], planes),
        'bn2': bn_params(ks[3], planes),
    }
    if stride != 1 or inplanes != planes:
        params['wd'] = bf16_exact(jax.random.normal(
            ks[4], (planes, inplanes, 1, 1), jnp.float32) * 0.2)
        params['bnd'] = bn_params(ks[5], planes)
    return params


if __name__ == "__main__":
    key = jax.random.PRNGKey(0)
    ka, kb, kc, kd = jax.random.split(key, 4)

    # Case A: downsample path (stride=2, inplanes != planes)
    x_a = jax.random.normal(ka, (2, 4, 16, 16), jnp.float32)
    x_a = x_a.astype(jnp.bfloat16).astype(jnp.float32)
    params_a = init_params(kb, inplanes=4, planes=8, stride=2)
    out_a = jax.block_until_ready(
        normal_rm_basic_block_forward(x_a, params_a, stride=2))
    ref_a = reference_forward(x_a, params_a, stride=2)
    assert out_a.shape == (2, 8, 8, 8)
    assert jnp.allclose(out_a, ref_a, atol=5e-2, rtol=5e-2), \
        f"max err A: {jnp.max(jnp.abs(out_a - ref_a))}"

    # Case B: identity shortcut (stride=1, inplanes == planes)
    x_b = jax.random.normal(kc, (2, 8, 16, 16), jnp.float32)
    x_b = x_b.astype(jnp.bfloat16).astype(jnp.float32)
    params_b = init_params(kd, inplanes=8, planes=8, stride=1)
    out_b = jax.block_until_ready(
        normal_rm_basic_block_forward(x_b, params_b, stride=1))
    ref_b = reference_forward(x_b, params_b, stride=1)
    assert out_b.shape == (2, 8, 16, 16)
    assert jnp.allclose(out_b, ref_b, atol=5e-2, rtol=5e-2), \
        f"max err B: {jnp.max(jnp.abs(out_b - ref_b))}"

    print("KERNEL_OK")
</pallas_src>

<mosaic_0001>
module attributes {stable_mosaic.version = 11 : i64} {
  func.func @kernel(%arg0: i32, %arg1: memref<1x100x36xbf16, #tpu.memory_space<vmem>>, %arg2: memref<36x128xbf16, #tpu.memory_space<vmem>>, %arg3: memref<9x128x128xbf16, #tpu.memory_space<vmem>>, %arg4: memref<36x128xbf16, #tpu.memory_space<vmem>>, %arg5: memref<1x128xf32, #tpu.memory_space<vmem>>, %arg6: memref<1x128xf32, #tpu.memory_space<vmem>>, %arg7: memref<100x1xf32, #tpu.memory_space<vmem>>, %arg8: memref<1x80x128xf32, #tpu.memory_space<vmem>>, %arg9: memref<102x128xbf16, #tpu.memory_space<vmem>>) attributes {dimension_semantics = [#tpu.dimension_semantics<parallel>], iteration_bounds = array<i64: 2>, scalar_prefetch = 0 : i64, scratch_operands = 1 : i64, tpu.core_type = #tpu.core_type<tc>, window_params = [{transform_indices = @transform_0, window_bounds = array<i64: 1, 100, 36>}, {pipeline_mode = #tpu.pipeline_mode<synchronous>, transform_indices = @transform_1, window_bounds = array<i64: 36, 128>}, {pipeline_mode = #tpu.pipeline_mode<synchronous>, transform_indices = @transform_2, window_bounds = array<i64: 9, 128, 128>}, {pipeline_mode = #tpu.pipeline_mode<synchronous>, transform_indices = @transform_3, window_bounds = array<i64: 36, 128>}, {pipeline_mode = #tpu.pipeline_mode<synchronous>, transform_indices = @transform_4, window_bounds = array<i64: 1, 128>}, {pipeline_mode = #tpu.pipeline_mode<synchronous>, transform_indices = @transform_5, window_bounds = array<i64: 1, 128>}, {pipeline_mode = #tpu.pipeline_mode<synchronous>, transform_indices = @transform_6, window_bounds = array<i64: 100, 1>}, {transform_indices = @transform_7, window_bounds = array<i64: 1, 80, 128>}]} {
    %c0_i32 = arith.constant 0 : i32
    %0 = arith.cmpi eq, %arg0, %c0_i32 : i32
    %1 = arith.extui %0 : i1 to i32
    %c0_i32_0 = arith.constant 0 : i32
    %2 = arith.cmpi ne, %1, %c0_i32_0 : i32
    scf.if %2 {
      %cst_64 = arith.constant 0.000000e+00 : bf16
      %74 = vector.broadcast %cst_64 : bf16 to vector<2x128xbf16>
      %c100 = arith.constant 100 : index
      %c0_65 = arith.constant 0 : index
      %75 = vector.load %arg9[%c100, %c0_65] : memref<102x128xbf16, #tpu.memory_space<vmem>>, vector<2x128xbf16>
      tpu.vector_store %arg9[%c100, %c0_65], %74 {strides = array<i32>} : memref<102x128xbf16, #tpu.memory_space<vmem>>, vector<2x128xbf16>,
    } else {
    }
    %c0 = arith.constant 0 : index
    %c0_1 = arith.constant 0 : index
    %c0_2 = arith.constant 0 : index
    %3 = vector.load %arg1[%c0, %c0_1, %c0_2] : memref<1x100x36xbf16, #tpu.memory_space<vmem>>, vector<1x100x36xbf16>
    %4 = vector.shape_cast %3 : vector<1x100x36xbf16> to vector<100x36xbf16>
    %c0_3 = arith.constant 0 : index
    %c0_4 = arith.constant 0 : index
    %5 = vector.load %arg2[%c0_3, %c0_4] : memref<36x128xbf16, #tpu.memory_space<vmem>>, vector<36x128xbf16>
    %cst = arith.constant dense<0.000000e+00> : vector<100x128xf32>
    %6 = tpu.matmul %4, %5, %cst {dimension_numbers = #tpu.dot_dimension_numbers<[1], [0], [0], [1], [0, 0, 1, 1], [], []>} : vector<100x36xbf16>, vector<36x128xbf16>, vector<100x128xf32> -> vector<100x128xf32>
    %c0_5 = arith.constant 0 : index
    %c0_6 = arith.constant 0 : index
    %7 = vector.load %arg5[%c0_5, %c0_6] : memref<1x128xf32, #tpu.memory_space<vmem>>, vector<1x128xf32>
    %8 = vector.broadcast %7 : vector<1x128xf32> to vector<100x128xf32>
    %9 = arith.addf %6, %8 : vector<100x128xf32>
    %cst_7 = arith.constant 0.000000e+00 : f32
    %10 = vector.broadcast %cst_7 : f32 to vector<100x128xf32>
    %11 = arith.maximumf %9, %10 : vector<100x128xf32>
    %c0_8 = arith.constant 0 : index
    %c0_9 = arith.constant 0 : index
    %12 = vector.load %arg7[%c0_8, %c0_9] : memref<100x1xf32, #tpu.memory_space<vmem>>, vector<100x1xf32>
    %13 = vector.broadcast %12 : vector<100x1xf32> to vector<100x128xf32>
    %14 = arith.mulf %11, %13 : vector<100x128xf32>
    %15 = arith.truncf %14 : vector<100x128xf32> to vector<100x128xbf16>
    %c0_10 = arith.constant 0 : index
    %c0_11 = arith.constant 0 : index
    %16 = vector.load %arg9[%c0_10, %c0_11] : memref<102x128xbf16, #tpu.memory_space<vmem>>, vector<100x128xbf16>
    tpu.vector_store %arg9[%c0_10, %c0_11], %15 {strides = array<i32>} : memref<102x128xbf16, #tpu.memory_space<vmem>>, vector<100x128xbf16>,
    %c0_12 = arith.constant 0 : index
    %c0_13 = arith.constant 0 : index
    %17 = vector.load %arg9[%c0_12, %c0_13] : memref<102x128xbf16, #tpu.memory_space<vmem>>, vector<80x128xbf16>
    %c0_14 = arith.constant 0 : index
    %c0_15 = arith.constant 0 : index
    %c0_16 = arith.constant 0 : index
    %18 = vector.load %arg3[%c0_14, %c0_15, %c0_16] : memref<9x128x128xbf16, #tpu.memory_space<vmem>>, vector<1x128x128xbf16>
    %19 = vector.shape_cast %18 : vector<1x128x128xbf16> to vector<128x128xbf16>
    %cst_17 = arith.constant dense<0.000000e+00> : vector<80x128xf32>
    %20 = tpu.matmul %17, %19, %cst_17 {dimension_numbers = #tpu.dot_dimension_numbers<[1], [0], [0], [1], [0, 0, 1, 1], [], []>} : vector<80x128xbf16>, vector<128x128xbf16>, vector<80x128xf32> -> vector<80x128xf32>
    %c1 = arith.constant 1 : index
    %c0_18 = arith.constant 0 : index
    %21 = vector.load %arg9[%c1, %c0_18] : memref<102x128xbf16, #tpu.memory_space<vmem>>, vector<80x128xbf16>
    %c1_19 = arith.constant 1 : index
    %c0_20 = arith.constant 0 : index
    %c0_21 = arith.constant 0 : index
    %22 = vector.load %arg3[%c1_19, %c0_20, %c0_21] : memref<9x128x128xbf16, #tpu.memory_space<vmem>>, vector<1x128x128xbf16>
    %23 = vector.shape_cast %22 : vector<1x128x128xbf16> to vector<128x128xbf16>
    %cst_22 = arith.constant dense<0.000000e+00> : vector<80x128xf32>
    %24 = tpu.matmul %21, %23, %cst_22 {dimension_numbers = #tpu.dot_dimension_numbers<[1], [0], [0], [1], [0, 0, 1, 1], [], []>} : vector<80x128xbf16>, vector<128x128xbf16>, vector<80x128xf32> -> vector<80x128xf32>
    %25 = arith.addf %20, %24 : vector<80x128xf32>
    %c2 = arith.constant 2 : index
    %c0_23 = arith.constant 0 : index
    %26 = vector.load %arg9[%c2, %c0_23] : memref<102x128xbf16, #tpu.memory_space<vmem>>, vector<80x128xbf16>
    %c2_24 = arith.constant 2 : index
    %c0_25 = arith.constant 0 : index
    %c0_26 = arith.constant 0 : index
    %27 = vector.load %arg3[%c2_24, %c0_25, %c0_26] : memref<9x128x128xbf16, #tpu.memory_space<vmem>>, vector<1x128x128xbf16>
    %28 = vector.shape_cast %27 : vector<1x128x128xbf16> to vector<128x128xbf16>
    %cst_27 = arith.constant dense<0.000000e+00> : vector<80x128xf32>
    %29 = tpu.matmul %26, %28, %cst_27 {dimension_numbers = #tpu.dot_dimension_numbers<[1], [0], [0], [1], [0, 0, 1, 1], [], []>} : vector<80x128xbf16>, vector<128x128xbf16>, vector<80x128xf32> -> vector<80x128xf32>
    %30 = arith.addf %25, %29 : vector<80x128xf32>
    %c10 = arith.constant 10 : index
    %c0_28 = arith.constant 0 : index
    %31 = vector.load %arg9[%c10, %c0_28] : memref<102x128xbf16, #tpu.memory_space<vmem>>, vector<80x128xbf16>
    %c3 = arith.constant 3 : index
    %c0_29 = arith.constant 0 : index
    %c0_30 = arith.constant 0 : index
    %32 = vector.load %arg3[%c3, %c0_29, %c0_30] : memref<9x128x128xbf16, #tpu.memory_space<vmem>>, vector<1x128x128xbf16>
    %33 = vector.shape_cast %32 : vector<1x128x128xbf16> to vector<128x128xbf16>
    %cst_31 = arith.constant dense<0.000000e+00> : vector<80x128xf32>
    %34 = tpu.matmul %31, %33, %cst_31 {dimension_numbers = #tpu.dot_dimension_numbers<[1], [0], [0], [1], [0, 0, 1, 1], [], []>} : vector<80x128xbf16>, vector<128x128xbf16>, vector<80x128xf32> -> vector<80x128xf32>
    %35 = arith.addf %30, %34 : vector<80x128xf32>
    %c11 = arith.constant 11 : index
    %c0_32 = arith.constant 0 : index
    %36 = vector.load %arg9[%c11, %c0_32] : memref<102x128xbf16, #tpu.memory_space<vmem>>, vector<80x128xbf16>
    %c4 = arith.constant 4 : index
    %c0_33 = arith.constant 0 : index
    %c0_34 = arith.constant 0 : index
    %37 = vector.load %arg3[%c4, %c0_33, %c0_34] : memref<9x128x128xbf16, #tpu.memory_space<vmem>>, vector<1x128x128xbf16>
    %38 = vector.shape_cast %37 : vector<1x128x128xbf16> to vector<128x128xbf16>
    %cst_35 = arith.constant dense<0.000000e+00> : vector<80x128xf32>
    %39 = tpu.matmul %36, %38, %cst_35 {dimension_numbers = #tpu.dot_dimension_numbers<[1], [0], [0], [1], [0, 0, 1, 1], [], []>} : vector<80x128xbf16>, vector<128x128xbf16>, vector<80x128xf32> -> vector<80x128xf32>
    %40 = arith.addf %35, %39 : vector<80x128xf32>
    %c12 = arith.constant 12 : index
    %c0_36 = arith.constant 0 : index
    %41 = vector.load %arg9[%c12, %c0_36] : memref<102x128xbf16, #tpu.memory_space<vmem>>, vector<80x128xbf16>
    %c5 = arith.constant 5 : index
    %c0_37 = arith.constant 0 : index
    %c0_38 = arith.constant 0 : index
    %42 = vector.load %arg3[%c5, %c0_37, %c0_38] : memref<9x128x128xbf16, #tpu.memory_space<vmem>>, vector<1x128x128xbf16>
    %43 = vector.shape_cast %42 : vector<1x128x128xbf16> to vector<128x128xbf16>
    %cst_39 = arith.constant dense<0.000000e+00> : vector<80x128xf32>
    %44 = tpu.matmul %41, %43, %cst_39 {dimension_numbers = #tpu.dot_dimension_numbers<[1], [0], [0], [1], [0, 0, 1, 1], [], []>} : vector<80x128xbf16>, vector<128x128xbf16>, vector<80x128xf32> -> vector<80x128xf32>
    %45 = arith.addf %40, %44 : vector<80x128xf32>
    %c20 = arith.constant 20 : index
    %c0_40 = arith.constant 0 : index
    %46 = vector.load %arg9[%c20, %c0_40] : memref<102x128xbf16, #tpu.memory_space<vmem>>, vector<80x128xbf16>
    %c6 = arith.constant 6 : index
    %c0_41 = arith.constant 0 : index
    %c0_42 = arith.constant 0 : index
    %47 = vector.load %arg3[%c6, %c0_41, %c0_42] : memref<9x128x128xbf16, #tpu.memory_space<vmem>>, vector<1x128x128xbf16>
    %48 = vector.shape_cast %47 : vector<1x128x128xbf16> to vector<128x128xbf16>
    %cst_43 = arith.constant dense<0.000000e+00> : vector<80x128xf32>
    %49 = tpu.matmul %46, %48, %cst_43 {dimension_numbers = #tpu.dot_dimension_numbers<[1], [0], [0], [1], [0, 0, 1, 1], [], []>} : vector<80x128xbf16>, vector<128x128xbf16>, vector<80x128xf32> -> vector<80x128xf32>
    %50 = arith.addf %45, %49 : vector<80x128xf32>
    %c21 = arith.constant 21 : index
    %c0_44 = arith.constant 0 : index
    %51 = vector.load %arg9[%c21, %c0_44] : memref<102x128xbf16, #tpu.memory_space<vmem>>, vector<80x128xbf16>
    %c7 = arith.constant 7 : index
    %c0_45 = arith.constant 0 : index
    %c0_46 = arith.constant 0 : index
    %52 = vector.load %arg3[%c7, %c0_45, %c0_46] : memref<9x128x128xbf16, #tpu.memory_space<vmem>>, vector<1x128x128xbf16>
    %53 = vector.shape_cast %52 : vector<1x128x128xbf16> to vector<128x128xbf16>
    %cst_47 = arith.constant dense<0.000000e+00> : vector<80x128xf32>
    %54 = tpu.matmul %51, %53, %cst_47 {dimension_numbers = #tpu.dot_dimension_numbers<[1], [0], [0], [1], [0, 0, 1, 1], [], []>} : vector<80x128xbf16>, vector<128x128xbf16>, vector<80x128xf32> -> vector<80x128xf32>
    %55 = arith.addf %50, %54 : vector<80x128xf32>
    %c22 = arith.constant 22 : index
    %c0_48 = arith.constant 0 : index
    %56 = vector.load %arg9[%c22, %c0_48] : memref<102x128xbf16, #tpu.memory_space<vmem>>, vector<80x128xbf16>
    %c8 = arith.constant 8 : index
    %c0_49 = arith.constant 0 : index
    %c0_50 = arith.constant 0 : index
    %57 = vector.load %arg3[%c8, %c0_49, %c0_50] : memref<9x128x128xbf16, #tpu.memory_space<vmem>>, vector<1x128x128xbf16>
    %58 = vector.shape_cast %57 : vector<1x128x128xbf16> to vector<128x128xbf16>
    %cst_51 = arith.constant dense<0.000000e+00> : vector<80x128xf32>
    %59 = tpu.matmul %56, %58, %cst_51 {dimension_numbers = #tpu.dot_dimension_numbers<[1], [0], [0], [1], [0, 0, 1, 1], [], []>} : vector<80x128xbf16>, vector<128x128xbf16>, vector<80x128xf32> -> vector<80x128xf32>
    %60 = arith.addf %55, %59 : vector<80x128xf32>
    %c0_52 = arith.constant 0 : index
    %c11_53 = arith.constant 11 : index
    %c0_54 = arith.constant 0 : index
    %61 = vector.load %arg1[%c0_52, %c11_53, %c0_54] : memref<1x100x36xbf16, #tpu.memory_space<vmem>>, vector<1x80x36xbf16>
    %62 = vector.shape_cast %61 : vector<1x80x36xbf16> to vector<80x36xbf16>
    %c0_55 = arith.constant 0 : index
    %c0_56 = arith.constant 0 : index
    %63 = vector.load %arg4[%c0_55, %c0_56] : memref<36x128xbf16, #tpu.memory_space<vmem>>, vector<36x128xbf16>
    %cst_57 = arith.constant dense<0.000000e+00> : vector<80x128xf32>
    %64 = tpu.matmul %62, %63, %cst_57 {dimension_numbers = #tpu.dot_dimension_numbers<[1], [0], [0], [1], [0, 0, 1, 1], [], []>} : vector<80x36xbf16>, vector<36x128xbf16>, vector<80x128xf32> -> vector<80x128xf32>
    %65 = arith.addf %60, %64 : vector<80x128xf32>
    %c0_58 = arith.constant 0 : index
    %c0_59 = arith.constant 0 : index
    %66 = vector.load %arg6[%c0_58, %c0_59] : memref<1x128xf32, #tpu.memory_space<vmem>>, vector<1x128xf32>
    %67 = vector.broadcast %66 : vector<1x128xf32> to vector<80x128xf32>
    %68 = arith.addf %65, %67 : vector<80x128xf32>
    %cst_60 = arith.constant 0.000000e+00 : f32
    %69 = vector.broadcast %cst_60 : f32 to vector<80x128xf32>
    %70 = arith.maximumf %68, %69 : vector<80x128xf32>
    %c0_61 = arith.constant 0 : index
    %c0_62 = arith.constant 0 : index
    %c0_63 = arith.constant 0 : index
    %71 = vector.load %arg8[%c0_61, %c0_62, %c0_63] : memref<1x80x128xf32, #tpu.memory_space<vmem>>, vector<1x80x128xf32>
    %72 = vector.shape_cast %71 : vector<1x80x128xf32> to vector<80x128xf32>
    %73 = vector.shape_cast %70 : vector<80x128xf32> to vector<1x80x128xf32>
    tpu.vector_store %arg8[%c0_61, %c0_62, %c0_63], %73 {strides = array<i32>} : memref<1x80x128xf32, #tpu.memory_space<vmem>>, vector<1x80x128xf32>,
    return
  }
  func.func @transform_0(%arg0: i32) -> (i32, i32, i32) {
    %c0_i32 = arith.constant 0 : i32
    %c0_i32_0 = arith.constant 0 : i32
    %c0_i32_1 = arith.constant 0 : i32
    return %arg0, %c0_i32, %c0_i32_0 : i32, i32, i32
  }
  func.func @transform_1(%arg0: i32) -> (i32, i32) {
    %c0_i32 = arith.constant 0 : i32
    %c0_i32_0 = arith.constant 0 : i32
    %c0_i32_1 = arith.constant 0 : i32
    return %c0_i32, %c0_i32_0 : i32, i32
  }
  func.func @transform_2(%arg0: i32) -> (i32, i32, i32) {
    %c0_i32 = arith.constant 0 : i32
    %c0_i32_0 = arith.constant 0 : i32
    %c0_i32_1 = arith.constant 0 : i32
    %c0_i32_2 = arith.constant 0 : i32
    return %c0_i32, %c0_i32_0, %c0_i32_1 : i32, i32, i32
  }
  func.func @transform_3(%arg0: i32) -> (i32, i32) {
    %c0_i32 = arith.constant 0 : i32
    %c0_i32_0 = arith.constant 0 : i32
    %c0_i32_1 = arith.constant 0 : i32
    return %c0_i32, %c0_i32_0 : i32, i32
  }
  func.func @transform_4(%arg0: i32) -> (i32, i32) {
    %c0_i32 = arith.constant 0 : i32
    %c0_i32_0 = arith.constant 0 : i32
    %c0_i32_1 = arith.constant 0 : i32
    return %c0_i32, %c0_i32_0 : i32, i32
  }
  func.func @transform_5(%arg0: i32) -> (i32, i32) {
    %c0_i32 = arith.constant 0 : i32
    %c0_i32_0 = arith.constant 0 : i32
    %c0_i32_1 = arith.constant 0 : i32
    return %c0_i32, %c0_i32_0 : i32, i32
  }
  func.func @transform_6(%arg0: i32) -> (i32, i32) {
    %c0_i32 = arith.constant 0 : i32
    %c0_i32_0 = arith.constant 0 : i32
    %c0_i32_1 = arith.constant 0 : i32
    return %c0_i32, %c0_i32_0 : i32, i32
  }
  func.func @transform_7(%arg0: i32) -> (i32, i32, i32) {
    %c0_i32 = arith.constant 0 : i32
    %c0_i32_0 = arith.constant 0 : i32
    %c0_i32_1 = arith.constant 0 : i32
    return %arg0, %c0_i32, %c0_i32_0 : i32, i32, i32
  }
}

</mosaic_0001>

<llo_original>
// kernel: tpu_custom_call.1
$region0: #{tpu_custom_call.1}
  #allocation0 [shape = 'u32[]', space=smem, size = 0x4, offset = 0x4, fixed_abs, tag = 'smem constant byte address 0x4 - core index']
  #allocation1 [shape = 'u32[72,128]{1,0:T(1,128)}', space=vmem, size = 0x9000, scoped, tag = 'internal scratch']
  #allocation2 [shape = 'bf16[102,128]{1,0:T(8,128)(2,1)}', space=vmem, size = 0x6800, scoped, tag = 'scratch operand']
  %s0 = inlined_call_operand.vmem [shape: bf16[2,100,36], index: 0, kind: input, shape index: {}]
  %s1 = inlined_call_operand.vmem [shape: bf16[36,128], index: 1, kind: input, shape index: {}]
  %s2 = inlined_call_operand.hbm [shape: bf16[9,128,128], index: 2, kind: input, shape index: {}]
  %s3 = inlined_call_operand.vmem [shape: bf16[36,128], index: 3, kind: input, shape index: {}]
  %s4 = inlined_call_operand.vmem [shape: f32[1,128], index: 4, kind: input, shape index: {}]
  %s5 = inlined_call_operand.vmem [shape: f32[1,128], index: 5, kind: input, shape index: {}]
  %s6 = inlined_call_operand.vmem [shape: f32[100,1], index: 6, kind: input, shape index: {}]
  %s7 = inlined_call_operand.hbm [shape: f32[2,80,128], index: 7, kind: output, shape index: {}]
  %s8 = sld [smem:[#allocation0]]
  $region69: #{tpu_custom_call.1} parent=0
    _
  %s10 = ssub.s32 1, %s8
  %s11 = scalar_select 0, %s10, %s8
  $region1: #{tpu_custom_call.1} parent=0
    #allocation3 [shape = 'u8[294912]{0}', space=vmem, size = 0x48000, scoped, tag = 'input window, operand 2, single buffered']
    #allocation4 [shape = 's32[2]{0}', space=sflag, size = 0x8, scoped, tag = 'scoped memory for tpu_custom_call.1']
    #allocation5 [shape = 's32[2]{0}', space=sflag, size = 0x8, scoped, tag = 'scoped memory for tpu_custom_call.1']
    #allocation6 [shape = 'u8[81920]{0}', space=vmem, size = 0x14000, scoped, tag = 'output window, operand 0']
    %12 = vsyncpa [#allocation4], 0
    %13 = vsyncpa [#allocation5], 0
    %s14 = scalar_lea.sflag [#allocation5], 1
    %15 = vsyncpa %s14, 0
    loop: start=0, step=1, limit=4
    $region2: #{tpu_custom_call.1} parent=1 // loop_pre_header
      _
    $region3: #{tpu_custom_call.1} parent=1 // loop_header
      %s17 = sphi 0, %s21
      %p18 = scmp.ge.s32.totalorder %s17, 4
      %s27 = sphi 0, %s29
      %s30 = sphi 0, %s27
      %s31 = sphi 0, %s30
      %s47 = sphi 0, %s31
      %s51 = sphi 0, %s51
      %s53 = sphi 0, %s51
      %s54 = sphi 0, %s53
      %s68 = sphi 0, %s54
      %s72 = sphi 0, %s72
      %s74 = sphi 0, %s72
      %s75 = sphi 0, %s74
      %s89 = sphi 0, %s75
      %s93 = sphi 0, %s93
      %s95 = sphi 0, %s93
      %s96 = sphi 0, %s95
      %s110 = sphi 0, %s96
      %s114 = sphi 0, %s114
      %s116 = sphi 0, %s114
      %s117 = sphi 0, %s116
      %s131 = sphi 0, %s117
      %s135 = sphi 0, %s135
      %s137 = sphi 0, %s135
      %s138 = sphi 0, %s137
      %s152 = sphi 0, %s138
      %s156 = sphi 0, %s156
      %s158 = sphi 0, %s156
      %s159 = sphi 0, %s158
      %s173 = sphi 0, %s159
      %s179 = sphi 0, %s181
      %s182 = sphi 0, %s179
      %s183 = sphi 0, %s182
      %s199 = sphi 0, %s183
    $region4: #{tpu_custom_call.1} parent=1 // loop_header_branch
      %20 = sbr.rel (%p18) target = $region8
    $region5: #{tpu_custom_call.1} parent=1 // loop_body
      %s22 = ssub.s32 %s17, 1
      %s23 = ssub.s32 %s17, 2
      %s24 = sadd.s32 %s17, 1
      %s25 = ssub.s32 %s17, %s24
      %p26 = scmp.eq.s32.totalorder %s25, 0
      %s28 = sadd.s32 %s27, 1
      %s29 = scalar_select %p26, %s27, %s28
      %p32 = pneg %p26
      %p33 = scmp.eq.s32.totalorder %s17, 1
      %p34 = por %p32, %p33
      %p35 = scmp.ne.s32.totalorder %s27, %s30
      %p36 = scmp.eq.s32.totalorder %s17, 0
      %p37 = por %p35, %p36
      %p38 = scmp.ne.s32.totalorder %s27, %s30
      %p39 = scmp.eq.s32.totalorder %s22, 1
      %p40 = por %p38, %p39
      %p41 = scmp.ne.s32.totalorder %s30, %s31
      %p42 = scmp.eq.s32.totalorder %s22, 0
      %p43 = por %p41, %p42
      %p44 = scmp.ne.s32.totalorder %s30, %s31
      %p45 = scmp.eq.s32.totalorder %s23, 1
      %p46 = por %p44, %p45
      %p48 = scmp.ne.s32.totalorder %s31, %s47
      %p49 = scmp.eq.s32.totalorder %s23, 0
      %p50 = por %p48, %p49
      %s52 = sadd.s32 %s51, 1
      %p55 = scmp.eq.s32.totalorder %s17, 1
      %p56 = scmp.ne.s32.totalorder %s51, %s53
      %p57 = scmp.eq.s32.totalorder %s17, 0
      %p58 = por %p56, %p57
      %p59 = scmp.ne.s32.totalorder %s51, %s53
      %p60 = scmp.eq.s32.totalorder %s22, 1
      %p61 = por %p59, %p60
      %p62 = scmp.ne.s32.totalorder %s53, %s54
      %p63 = scmp.eq.s32.totalorder %s22, 0
      %p64 = por %p62, %p63
      %p65 = scmp.ne.s32.totalorder %s53, %s54
      %p66 = scmp.eq.s32.totalorder %s23, 1
      %p67 = por %p65, %p66
      %p69 = scmp.ne.s32.totalorder %s54, %s68
      %p70 = scmp.eq.s32.totalorder %s23, 0
      %p71 = por %p69, %p70
      %s73 = sadd.s32 %s72, 1
      %p76 = scmp.eq.s32.totalorder %s17, 1
      %p77 = scmp.ne.s32.totalorder %s72, %s74
      %p78 = scmp.eq.s32.totalorder %s17, 0
      %p79 = por %p77, %p78
      %p80 = scmp.ne.s32.totalorder %s72, %s74
      %p81 = scmp.eq.s32.totalorder %s22, 1
      %p82 = por %p80, %p81
      %p83 = scmp.ne.s32.totalorder %s74, %s75
      %p84 = scmp.eq.s32.totalorder %s22, 0
      %p85 = por %p83, %p84
      %p86 = scmp.ne.s32.totalorder %s74, %s75
      %p87 = scmp.eq.s32.totalorder %s23, 1
      %p88 = por %p86, %p87
      %p90 = scmp.ne.s32.totalorder %s75, %s89
      %p91 = scmp.eq.s32.totalorder %s23, 0
      %p92 = por %p90, %p91
      %s94 = sadd.s32 %s93, 1
      %p97 = scmp.eq.s32.totalorder %s17, 1
      %p98 = scmp.ne.s32.totalorder %s93, %s95
      %p99 = scmp.eq.s32.totalorder %s17, 0
      %p100 = por %p98, %p99
      %p101 = scmp.ne.s32.totalorder %s93, %s95
      %p102 = scmp.eq.s32.totalorder %s22, 1
      %p103 = por %p101, %p102
      %p104 = scmp.ne.s32.totalorder %s95, %s96
      %p105 = scmp.eq.s32.totalorder %s22, 0
      %p106 = por %p104, %p105
      %p107 = scmp.ne.s32.totalorder %s95, %s96
      %p108 = scmp.eq.s32.totalorder %s23, 1
      %p109 = por %p107, %p108
      %p111 = scmp.ne.s32.totalorder %s96, %s110
      %p112 = scmp.eq.s32.totalorder %s23, 0
      %p113 = por %p111, %p112
      %s115 = sadd.s32 %s114, 1
      %p118 = scmp.eq.s32.totalorder %s17, 1
      %p119 = scmp.ne.s32.totalorder %s114, %s116
      %p120 = scmp.eq.s32.totalorder %s17, 0
      %p121 = por %p119, %p120
      %p122 = scmp.ne.s32.totalorder %s114, %s116
      %p123 = scmp.eq.s32.totalorder %s22, 1
      %p124 = por %p122, %p123
      %p125 = scmp.ne.s32.totalorder %s116, %s117
      %p126 = scmp.eq.s32.totalorder %s22, 0
      %p127 = por %p125, %p126
      %p128 = scmp.ne.s32.totalorder %s116, %s117
      %p129 = scmp.eq.s32.totalorder %s23, 1
      %p130 = por %p128, %p129
      %p132 = scmp.ne.s32.totalorder %s117, %s131
      %p133 = scmp.eq.s32.totalorder %s23, 0
      %p134 = por %p132, %p133
      %s136 = sadd.s32 %s135, 1
      %p139 = scmp.eq.s32.totalorder %s17, 1
      %p140 = scmp.ne.s32.totalorder %s135, %s137
      %p141 = scmp.eq.s32.totalorder %s17, 0
      %p142 = por %p140, %p141
      %p143 = scmp.ne.s32.totalorder %s135, %s137
      %p144 = scmp.eq.s32.totalorder %s22, 1
      %p145 = por %p143, %p144
      %p146 = scmp.ne.s32.totalorder %s137, %s138
      %p147 = scmp.eq.s32.totalorder %s22, 0
      %p148 = por %p146, %p147
      %p149 = scmp.ne.s32.totalorder %s137, %s138
      %p150 = scmp.eq.s32.totalorder %s23, 1
      %p151 = por %p149, %p150
      %p153 = scmp.ne.s32.totalorder %s138, %s152
      %p154 = scmp.eq.s32.totalorder %s23, 0
      %p155 = por %p153, %p154
      %s157 = sadd.s32 %s156, 1
      %p160 = scmp.eq.s32.totalorder %s17, 1
      %p161 = scmp.ne.s32.totalorder %s156, %s158
      %p162 = scmp.eq.s32.totalorder %s17, 0
      %p163 = por %p161, %p162
      %p164 = scmp.ne.s32.totalorder %s156, %s158
      %p165 = scmp.eq.s32.totalorder %s22, 1
      %p166 = por %p164, %p165
      %p167 = scmp.ne.s32.totalorder %s158, %s159
      %p168 = scmp.eq.s32.totalorder %s22, 0
      %p169 = por %p167, %p168
      %p170 = scmp.ne.s32.totalorder %s158, %s159
      %p171 = scmp.eq.s32.totalorder %s23, 1
      %p172 = por %p170, %p171
      %p174 = scmp.ne.s32.totalorder %s159, %s173
      %p175 = scmp.eq.s32.totalorder %s23, 0
      %p176 = por %p174, %p175
      %s177 = ssub.s32 %s17, %s24
      %p178 = scmp.eq.s32.totalorder %s177, 0
      %s180 = sadd.s32 %s179, 1
      %s181 = scalar_select %p178, %s179, %s180
      %p184 = pneg %p178
      %p185 = scmp.eq.s32.totalorder %s17, 1
      %p186 = por %p184, %p185
      %p187 = scmp.ne.s32.totalorder %s179, %s182
      %p188 = scmp.eq.s32.totalorder %s17, 0
      %p189 = por %p187, %p188
      %p190 = scmp.ne.s32.totalorder %s179, %s182
      %p191 = scmp.eq.s32.totalorder %s22, 1
      %p192 = por %p190, %p191
      %p193 = scmp.ne.s32.totalorder %s182, %s183
      %p194 = scmp.eq.s32.totalorder %s22, 0
      %p195 = por %p193, %p194
      %p196 = scmp.ne.s32.totalorder %s182, %s183
      %p197 = scmp.eq.s32.totalorder %s23, 1
      %p198 = por %p196, %p197
      %p200 = scmp.ne.s32.totalorder %s183, %s199
      %p201 = scmp.eq.s32.totalorder %s23, 0
      %p202 = por %p200, %p201
      %p203 = scmp.le.s32.totalorder 1, %s17
      %p204 = scmp.lt.s32.totalorder %s17, 3
      %p205 = pnand %p203, %p204
      %p206 = pneg %p205
      // Predicated region
      $region9: #{tpu_custom_call.1} parent=5 // pred_check
        _
      $region10: #{tpu_custom_call.1} parent=5 // pred_check_branch
        %208 = sbr.rel (%p205) target = $region12
      $region11: #{tpu_custom_call.1} parent=5 // pred_region
        %s209 = ssub.s32 %s17, 1
        // Predicated region
        $region13: #{tpu_custom_call.1} parent=11 // pred_check
          %p210 = pneg %p64
        $region14: #{tpu_custom_call.1} parent=11 // pred_check_branch
          %212 = sbr.rel (%p210) target = $region16
        $region15: #{tpu_custom_call.1} parent=11 // pred_region
          _
        $region16: #{tpu_custom_call.1} parent=11 // pred_fallthru
          _
        // Predicated region
        $region17: #{tpu_custom_call.1} parent=11 // pred_check
          %p213 = pneg %p85
        $region18: #{tpu_custom_call.1} parent=11 // pred_check_branch
          %215 = sbr.rel (%p213) target = $region20
        $region19: #{tpu_custom_call.1} parent=11 // pred_region
          %217 = vsyncadd [#allocation4], 0
          %s218 = sshll.u32 %s2, 4
          %s219 = int_to_ptr.hbm [resolvable:$true] %s218
          %s220 = sshll.u32 [#allocation3], 4
          %s221 = int_to_ptr.vmem [resolvable:$true] %s220
          %226 = dma.hbm_to_vmem [thread:$0]  %s219, 9216, %s221, [#allocation4], 64, 64, 4
        $region20: #{tpu_custom_call.1} parent=11 // pred_fallthru
          _
        // Predicated region
        $region21: #{tpu_custom_call.1} parent=11 // pred_check
          %p227 = pneg %p106
        $region22: #{tpu_custom_call.1} parent=11 // pred_check_branch
          %229 = sbr.rel (%p227) target = $region24
        $region23: #{tpu_custom_call.1} parent=11 // pred_region
          _
        $region24: #{tpu_custom_call.1} parent=11 // pred_fallthru
          _
        // Predicated region
        $region25: #{tpu_custom_call.1} parent=11 // pred_check
          %p230 = pneg %p127
        $region26: #{tpu_custom_call.1} parent=11 // pred_check_branch
          %232 = sbr.rel (%p230) target = $region28
        $region27: #{tpu_custom_call.1} parent=11 // pred_region
          _
        $region28: #{tpu_custom_call.1} parent=11 // pred_fallthru
          _
        // Predicated region
        $region29: #{tpu_custom_call.1} parent=11 // pred_check
          %p233 = pneg %p148
        $region30: #{tpu_custom_call.1} parent=11 // pred_check_branch
          %235 = sbr.rel (%p233) target = $region32
        $region31: #{tpu_custom_call.1} parent=11 // pred_region
          _
        $region32: #{tpu_custom_call.1} parent=11 // pred_fallthru
          _
        // Predicated region
        $region33: #{tpu_custom_call.1} parent=11 // pred_check
          %p236 = pneg %p169
        $region34: #{tpu_custom_call.1} parent=11 // pred_check_branch
          %238 = sbr.rel (%p236) target = $region36
        $region35: #{tpu_custom_call.1} parent=11 // pred_region
          _
        $region36: #{tpu_custom_call.1} parent=11 // pred_fallthru
          _
      $region12: #{tpu_custom_call.1} parent=5 // pred_fallthru
        _
      %p239 = scmp.lt.s32.totalorder %s17, 2
      // Predicated region
      $region37: #{tpu_custom_call.1} parent=5 // pred_check
        %p240 = pneg %p239
      $region38: #{tpu_custom_call.1} parent=5 // pred_check_branch
        %242 = sbr.rel (%p240) target = $region40
      $region39: #{tpu_custom_call.1} parent=5 // pred_region
        // Predicated region
        $region41: #{tpu_custom_call.1} parent=39 // pred_check
          %p243 = pneg %p37
        $region42: #{tpu_custom_call.1} parent=39 // pred_check_branch
          %245 = sbr.rel (%p243) target = $region44
        $region43: #{tpu_custom_call.1} parent=39 // pred_region
          %p246 = scmp.lt.s32.totalorder %s17, 1
          %s247 = scalar_select %p246, %s17, 1
          %s248 = smul.addr %s247, 13
          %s249 = smul.addr %s248, 4
          %s250 = scalar_lea.vmem %s0, %s249
        $region44: #{tpu_custom_call.1} parent=39 // pred_fallthru
          _
      $region40: #{tpu_custom_call.1} parent=5 // pred_fallthru
        _
      %p251 = scmp.le.s32.totalorder 1, %s17
      %p252 = scmp.lt.s32.totalorder %s17, 3
      %p253 = pnand %p251, %p252
      %p254 = pneg %p253
      // Predicated region
      $region45: #{tpu_custom_call.1} parent=5 // pred_check
        _
      $region46: #{tpu_custom_call.1} parent=5 // pred_check_branch
        %256 = sbr.rel (%p253) target = $region48
      $region47: #{tpu_custom_call.1} parent=5 // pred_region
        %s257 = ssub.s32 %s17, 1
        // Predicated region
        $region49: #{tpu_custom_call.1} parent=47 // pred_check
          %p258 = pneg %p85
        $region50: #{tpu_custom_call.1} parent=47 // pred_check_branch
          %260 = sbr.rel (%p258) target = $region52
        $region51: #{tpu_custom_call.1} parent=47 // pred_region
          %262 = dma.done [#allocation4], 9216
        $region52: #{tpu_custom_call.1} parent=47 // pred_fallthru
          _
        %p263 = scmp.lt.s32.totalorder %s22, 1
        %s264 = scalar_select %p263, %s22, 1
        %s265 = smul.addr %s264, 13
        %s266 = smul.addr %s265, 4
        %s267 = scalar_lea.vmem %s0, %s266
        %p268 = pneg %p43
        %p269 = pneg %p40
        %p270 = pneg %p64
        %p271 = pneg %p61
        %p272 = pneg %p85
        %p273 = pneg %p82
        %p274 = pneg %p106
        %p275 = pneg %p103
        %p276 = pneg %p127
        %p277 = pneg %p124
        %p278 = pneg %p148
        %p279 = pneg %p145
        %p280 = pneg %p169
        %p281 = pneg %p166
        %p282 = pneg %p195
        %p283 = pneg %p192
        %s284 = sand.u32 %s182, 1
        %s285 = scalar_lea.sflag [#allocation5], %s284
        %s286 = sand.u32 %s182, 1
        %s287 = smul.addr %s286, 80
        %s288 = scalar_lea.vmem [#allocation6], %s287
        %p289 = scmp.lt.s32.totalorder %s22, 1
        %s290 = scalar_select %p289, %s22, 1
        %s291 = smul.addr %s290, 13
        %s292 = smul.addr %s291, 4
        %s293 = scalar_lea.vmem %s0, %s292
        %p295 = scmp.eq.s32.totalorder %s22, 0
        // Predicated region
        $region53: #{tpu_custom_call.1} parent=47 // pred_check
          %p296 = pneg %p295
        $region54: #{tpu_custom_call.1} parent=47 // pred_check_branch
          %298 = sbr.rel (%p296) target = $region56
        $region55: #{tpu_custom_call.1} parent=47 // pred_region
          %299 = vst [vmem:[#allocation2 + $0x30] sm:$0x4] 0
        $region56: #{tpu_custom_call.1} parent=47 // pred_fallthru
          _
        %v300 = vld [vmem:[%s293] sm:$0xf]
        %v301 = vld [vmem:[%s293 + $0x4] sm:$0xf]
        %v302 = vld [vmem:[%s293 + $0x8] sm:$0xf]
        %v303 = vld [vmem:[%s293 + $0xc] sm:$0xf]
        %v304 = vld [vmem:[%s293 + $0x10] sm:$0xf]
        %v305 = vld [vmem:[%s293 + $0x14] sm:$0xf]
        %v306 = vld [vmem:[%s293 + $0x18] sm:$0xf]
        %v307 = vld [vmem:[%s293 + $0x1c] sm:$0xf]
        %v308 = vld [vmem:[%s293 + $0x20] sm:$0xf]
        %v309 = vld [vmem:[%s293 + $0x24] sm:$0xf]
        %v310 = vld [vmem:[%s293 + $0x28] sm:$0xf]
        %v311 = vld [vmem:[%s293 + $0x2c] sm:$0xf]
        %v312 = vld [vmem:[%s293 + $0x30] sm:$0x3]
        %v313 = vld [vmem:[%s1] sm:$0xf]
        %v314 = vld [vmem:[%s1 + $0x4] sm:$0xf]
        %v315 = vld [vmem:[%s1 + $0x8] sm:$0xf]
        %v316 = vld [vmem:[%s1 + $0xc] sm:$0xf]
        %v317 = vld [vmem:[%s1 + $0x10] sm:$0x3]
        %v318 = vld [vmem:[%s4] sm:$0x1]
        %v320 = vperm.slane %v318, 0
        %v335 = vunpack.c.l.b16 %v300
        %v336 = vunpack.c.l.b16 %v301
        %v337 = vunpack.c.l.b16 %v302
        %v338 = vunpack.c.l.b16 %v303
        %v339 = vunpack.c.l.b16 %v304
        %v340 = vunpack.c.l.b16 %v305
        %v341 = vunpack.c.l.b16 %v306
        %v342 = vunpack.c.l.b16 %v307
        %v343 = vunpack.c.l.b16 %v308
        %v344 = vunpack.c.l.b16 %v309
        %v345 = vunpack.c.l.b16 %v310
        %v346 = vunpack.c.l.b16 %v311
        %v347 = vunpack.c.l.b16 %v312
        %v348 = vpack.c.b16 %v336, %v335
        %v349 = vpack.c.b16 %v338, %v337
        %v350 = vpack.c.b16 %v340, %v339
        %v351 = vpack.c.b16 %v342, %v341
        %v352 = vpack.c.b16 %v344, %v343
        %v353 = vpack.c.b16 %v346, %v345
        %v354 = vpack.c.b16 %v347, %v347
        %v360 = vunpack.c.l.b16 %v313
        %v361 = vunpack.c.l.b16 %v314
        %v362 = vunpack.c.l.b16 %v315
        %v363 = vunpack.c.l.b16 %v316
        %v364 = vunpack.c.l.b16 %v317
        %v365 = vpack.c.b16 %v361, %v360
        %v366 = vpack.c.b16 %v363, %v362
        %v367 = vpack.c.b16 %v364, %v364
        %vm370 = vcmask 293888
        %v372 = vsel %vm370, %v348, 0
        %v375 = vsel %vm370, %v349, 0
        %v378 = vsel %vm370, %v350, 0
        %v381 = vsel %vm370, %v351, 0
        %v384 = vsel %vm370, %v352, 0
        %v387 = vsel %vm370, %v353, 0
        %v390 = vsel %vm370, %v354, 0
        %vm392 = vcmask 1041408
        %v394 = vsel %vm392, %v367, 0
        %396 = vmatpush.bf16.msra.mxu0 0
        %397 = vmatpush.bf16.msra.mxu0 0
        %398 = vmatpush.bf16.msra.mxu0 0
        %399 = vmatpush.bf16.msra.mxu0 0
        %400 = vmatpush.bf16.msra.mxu0 0
        %401 = vmatpush.bf16.msra.mxu0 %v394
        %402 = vmatpush.bf16.msra.mxu0 %v366
        %403 = vmatpush.bf16.msra.mxu0 %v365
        %404 = vmatmul.bf16.gmra.mxu0 %v372
        %v405 = vpop.f32.mrf.mxu0
        %v406 = vadd.f32 %v320, %v405
        %v407 = vpop.f32.mrf.mxu0
        %v408 = vadd.f32 %v320, %v407
        %409 = vmatmul.bf16.gmra.mxu0 %v375
        %v410 = vpop.f32.mrf.mxu0
        %v411 = vadd.f32 %v320, %v410
        %v412 = vpop.f32.mrf.mxu0
        %v413 = vadd.f32 %v320, %v412
        %414 = vmatmul.bf16.gmra.mxu0 %v378
        %v415 = vpop.f32.mrf.mxu0
        %v416 = vadd.f32 %v320, %v415
        %v417 = vpop.f32.mrf.mxu0
        %v418 = vadd.f32 %v320, %v417
        %419 = vmatmul.bf16.gmra.mxu0 %v381
        %v420 = vpop.f32.mrf.mxu0
        %v421 = vadd.f32 %v320, %v420
        %v422 = vpop.f32.mrf.mxu0
        %v423 = vadd.f32 %v320, %v422
        %424 = vmatmul.bf16.gmra.mxu0 %v384
        %v425 = vpop.f32.mrf.mxu0
        %v426 = vadd.f32 %v320, %v425
        %v427 = vpop.f32.mrf.mxu0
        %v428 = vadd.f32 %v320, %v427
        %429 = vmatmul.bf16.gmra.mxu0 %v387
        %v430 = vpop.f32.mrf.mxu0
        %v431 = vadd.f32 %v320, %v430
        %v432 = vpop.f32.mrf.mxu0
        %v433 = vadd.f32 %v320, %v432
        %434 = vmatmul.bf16.gmra.mxu0 %v390
        %v435 = vpop.f32.mrf.mxu0
        %v436 = vadd.f32 %v320, %v435
        %v437 = vpop.f32.mrf.mxu0
        %438 = vdwg.mxu0
        %v439 = vmax.f32 %v406, 0.0
        %v440 = vmax.f32 %v408, 0.0
        %v441 = vmax.f32 %v411, 0.0
        %v442 = vmax.f32 %v413, 0.0
        %v443 = vmax.f32 %v416, 0.0
        %v444 = vmax.f32 %v418, 0.0
        %v445 = vmax.f32 %v421, 0.0
        %v446 = vmax.f32 %v423, 0.0
        %v447 = vmax.f32 %v426, 0.0
        %v448 = vmax.f32 %v428, 0.0
        %v449 = vmax.f32 %v431, 0.0
        %v450 = vmax.f32 %v433, 0.0
        %v451 = vmax.f32 %v436, 0.0
        %v452 = vld [vmem:[%s6] sm:$0xff]
        %v453 = vld [vmem:[%s6 + $0x8] sm:$0xff]
        %v454 = vld [vmem:[%s6 + $0x10] sm:$0xff]
        %v455 = vld [vmem:[%s6 + $0x18] sm:$0xff]
        %v456 = vld [vmem:[%s6 + $0x20] sm:$0xff]
        %v457 = vld [vmem:[%s6 + $0x28] sm:$0xff]
        %v458 = vld [vmem:[%s6 + $0x30] sm:$0xff]
        %v459 = vld [vmem:[%s6 + $0x38] sm:$0xff]
        %v460 = vld [vmem:[%s6 + $0x40] sm:$0xff]
        %v461 = vld [vmem:[%s6 + $0x48] sm:$0xff]
        %v462 = vld [vmem:[%s6 + $0x50] sm:$0xff]
        %v463 = vld [vmem:[%s6 + $0x58] sm:$0xff]
        %v464 = vld [vmem:[%s6 + $0x60] sm:$0xf]
        %466 = vset.pattern.permute.xlu0 0
        %467 = vperm.xlu0 %466, %v452
        %v468 = vpop.permute.xlu0 %467
        %471 = vset.pattern.permute.xlu0 0
        %472 = vperm.xlu0 %471, %v453
        %v473 = vpop.permute.xlu0 %472
        %476 = vset.pattern.permute.xlu0 0
        %477 = vperm.xlu0 %476, %v454
        %v478 = vpop.permute.xlu0 %477
        %481 = vset.pattern.permute.xlu0 0
        %482 = vperm.xlu0 %481, %v455
        %v483 = vpop.permute.xlu0 %482
        %486 = vset.pattern.permute.xlu0 0
        %487 = vperm.xlu0 %486, %v456
        %v488 = vpop.permute.xlu0 %487
        %491 = vset.pattern.permute.xlu0 0
        %492 = vperm.xlu0 %491, %v457
        %v493 = vpop.permute.xlu0 %492
        %496 = vset.pattern.permute.xlu0 0
        %497 = vperm.xlu0 %496, %v458
        %v498 = vpop.permute.xlu0 %497
        %501 = vset.pattern.permute.xlu0 0
        %502 = vperm.xlu0 %501, %v459
        %v503 = vpop.permute.xlu0 %502
        %506 = vset.pattern.permute.xlu0 0
        %507 = vperm.xlu0 %506, %v460
        %v508 = vpop.permute.xlu0 %507
        %511 = vset.pattern.permute.xlu0 0
        %512 = vperm.xlu0 %511, %v461
        %v513 = vpop.permute.xlu0 %512
        %516 = vset.pattern.permute.xlu0 0
        %517 = vperm.xlu0 %516, %v462
        %v518 = vpop.permute.xlu0 %517
        %521 = vset.pattern.permute.xlu0 0
        %522 = vperm.xlu0 %521, %v463
        %v523 = vpop.permute.xlu0 %522
        %526 = vset.pattern.permute.xlu0 0
        %527 = vperm.xlu0 %526, %v464
        %v528 = vpop.permute.xlu0 %527
        %v530 = vmul.f32 %v439, %v468
        %v531 = vmul.f32 %v440, %v473
        %v532 = vmul.f32 %v441, %v478
        %v533 = vmul.f32 %v442, %v483
        %v534 = vmul.f32 %v443, %v488
        %v535 = vmul.f32 %v444, %v493
        %v536 = vmul.f32 %v445, %v498
        %v537 = vmul.f32 %v446, %v503
        %v538 = vmul.f32 %v447, %v508
        %v539 = vmul.f32 %v448, %v513
        %v540 = vmul.f32 %v449, %v518
        %v541 = vmul.f32 %v450, %v523
        %v542 = vmul.f32 %v451, %v528
        %v543 = vpack.c.bf16 %v530, %v530
        %v544 = vpack.c.bf16 %v531, %v531
        %v545 = vpack.c.bf16 %v532, %v532
        %v546 = vpack.c.bf16 %v533, %v533
        %v547 = vpack.c.bf16 %v534, %v534
        %v548 = vpack.c.bf16 %v535, %v535
        %v549 = vpack.c.bf16 %v536, %v536
        %v550 = vpack.c.bf16 %v537, %v537
        %v551 = vpack.c.bf16 %v538, %v538
        %v552 = vpack.c.bf16 %v539, %v539
        %v553 = vpack.c.bf16 %v540, %v540
        %v554 = vpack.c.bf16 %v541, %v541
        %v555 = vpack.c.bf16 %v542, %v542
        %556 = vst [vmem:[#allocation2] sm:$0xf] %v543
        %557 = vst [vmem:[#allocation2 + $0x4] sm:$0xf] %v544
        %558 = vst [vmem:[#allocation2 + $0x8] sm:$0xf] %v545
        %559 = vst [vmem:[#allocation2 + $0xc] sm:$0xf] %v546
        %560 = vst [vmem:[#allocation2 + $0x10] sm:$0xf] %v547
        %561 = vst [vmem:[#allocation2 + $0x14] sm:$0xf] %v548
        %562 = vst [vmem:[#allocation2 + $0x18] sm:$0xf] %v549
        %563 = vst [vmem:[#allocation2 + $0x1c] sm:$0xf] %v550
        %564 = vst [vmem:[#allocation2 + $0x20] sm:$0xf] %v551
        %565 = vst [vmem:[#allocation2 + $0x24] sm:$0xf] %v552
        %566 = vst [vmem:[#allocation2 + $0x28] sm:$0xf] %v553
        %567 = vst [vmem:[#allocation2 + $0x2c] sm:$0xf] %v554
        %568 = vst [vmem:[#allocation2 + $0x30] sm:$0x3] %v555
        %v569 = vld [vmem:[#allocation2] sm:$0xf]
        %v570 = vld [vmem:[#allocation2 + $0x4] sm:$0xf]
        %v571 = vld [vmem:[#allocation2 + $0x8] sm:$0xf]
        %v572 = vld [vmem:[#allocation2 + $0xc] sm:$0xf]
        %v573 = vld [vmem:[#allocation2 + $0x10] sm:$0xf]
        %v574 = vld [vmem:[#allocation2 + $0x14] sm:$0xf]
        %v575 = vld [vmem:[#allocation2 + $0x18] sm:$0xf]
        %v576 = vld [vmem:[#allocation2 + $0x1c] sm:$0xf]
        %v577 = vld [vmem:[#allocation2 + $0x20] sm:$0xf]
        %v578 = vld [vmem:[#allocation2 + $0x24] sm:$0xf]
        %v579 = vld [vmem:[#allocation3] sm:$0xf]
        %v580 = vld [vmem:[#allocation3 + $0x4] sm:$0xf]
        %v581 = vld [vmem:[#allocation3 + $0x8] sm:$0xf]
        %v582 = vld [vmem:[#allocation3 + $0xc] sm:$0xf]
        %v583 = vld [vmem:[#allocation3 + $0x10] sm:$0xf]
        %v584 = vld [vmem:[#allocation3 + $0x14] sm:$0xf]
        %v585 = vld [vmem:[#allocation3 + $0x18] sm:$0xf]
        %v586 = vld [vmem:[#allocation3 + $0x1c] sm:$0xf]
        %v587 = vld [vmem:[#allocation3 + $0x20] sm:$0xf]
        %v588 = vld [vmem:[#allocation3 + $0x24] sm:$0xf]
        %v589 = vld [vmem:[#allocation3 + $0x28] sm:$0xf]
        %v590 = vld [vmem:[#allocation3 + $0x2c] sm:$0xf]
        %v591 = vld [vmem:[#allocation3 + $0x30] sm:$0xf]
        %v592 = vld [vmem:[#allocation3 + $0x34] sm:$0xf]
        %v593 = vld [vmem:[#allocation3 + $0x38] sm:$0xf]
        %v594 = vld [vmem:[#allocation3 + $0x3c] sm:$0xf]
        %v595 = vld [vmem:[#allocation2 + $0x28] sm:$0x1]
        %s596 = scalar_lea.vmem [#allocation3], 64
        %v597 = vld [vmem:[%s596] sm:$0xf]
        %v598 = vld [vmem:[%s596 + $0x4] sm:$0xf]
        %v599 = vld [vmem:[%s596 + $0x8] sm:$0xf]
        %v600 = vld [vmem:[%s596 + $0xc] sm:$0xf]
        %v601 = vld [vmem:[%s596 + $0x10] sm:$0xf]
        %v602 = vld [vmem:[%s596 + $0x14] sm:$0xf]
        %v603 = vld [vmem:[%s596 + $0x18] sm:$0xf]
        %v604 = vld [vmem:[%s596 + $0x1c] sm:$0xf]
        %v605 = vld [vmem:[%s596 + $0x20] sm:$0xf]
        %v606 = vld [vmem:[%s596 + $0x24] sm:$0xf]
        %v607 = vld [vmem:[%s596 + $0x28] sm:$0xf]
        %v608 = vld [vmem:[%s596 + $0x2c] sm:$0xf]
        %v609 = vld [vmem:[%s596 + $0x30] sm:$0xf]
        %v610 = vld [vmem:[%s596 + $0x34] sm:$0xf]
        %v611 = vld [vmem:[%s596 + $0x38] sm:$0xf]
        %v612 = vld [vmem:[%s596 + $0x3c] sm:$0xf]
        %v624 = vunpack.c.l.b16 %v569
        %v625 = vunpack.c.l.b16 %v570
        %v626 = vunpack.c.l.b16 %v571
        %v627 = vunpack.c.l.b16 %v572
        %v628 = vunpack.c.l.b16 %v573
        %v629 = vunpack.c.l.b16 %v574
        %v630 = vunpack.c.l.b16 %v575
        %v631 = vunpack.c.l.b16 %v576
        %v632 = vunpack.c.l.b16 %v577
        %v633 = vunpack.c.l.b16 %v578
        %v634 = vunpack.c.l.b16 %v595
        %v635 = vpack.c.b16 %v625, %v624
        %v636 = vpack.c.b16 %v627, %v626
        %v637 = vpack.c.b16 %v629, %v628
        %v638 = vpack.c.b16 %v631, %v630
        %v639 = vpack.c.b16 %v633, %v632
        %v640 = vpack.c.b16 %v634, %v634
        %vm641 = vsmask.f32 7424
        %v643 = vshrl.u32 %v635, 16
        %v645 = vshll.u32 %v635, 16
        %v647 = vrot.slane %v645, 1
        %v648 = vor.u32 %v643, %v647
        %v650 = vshll.u32 %v636, 16
        %v652 = vrot.slane %v650, 1
        %v653 = vsel %vm641, %v648, %v652
        %v654 = vshrl.u32 %v636, 16
        %v656 = vor.u32 %v654, %v652
        %v658 = vshll.u32 %v637, 16
        %v660 = vrot.slane %v658, 1
        %v661 = vsel %vm641, %v656, %v660
        %v662 = vshrl.u32 %v637, 16
        %v664 = vor.u32 %v662, %v660
        %v666 = vshll.u32 %v638, 16
        %v668 = vrot.slane %v666, 1
        %v669 = vsel %vm641, %v664, %v668
        %v670 = vshrl.u32 %v638, 16
        %v672 = vor.u32 %v670, %v668
        %v674 = vshll.u32 %v639, 16
        %v676 = vrot.slane %v674, 1
        %v677 = vsel %vm641, %v672, %v676
        %v678 = vshrl.u32 %v639, 16
        %v680 = vor.u32 %v678, %v676
        %v682 = vshll.u32 %v640, 16
        %v684 = vrot.slane %v682, 1
        %v685 = vsel %vm641, %v680, %v684
        %v707 = vunpack.c.l.b16 %v597
        %v708 = vunpack.c.l.b16 %v598
        %v709 = vunpack.c.l.b16 %v599
        %v710 = vunpack.c.l.b16 %v600
        %v711 = vunpack.c.l.b16 %v601
        %v712 = vunpack.c.l.b16 %v602
        %v713 = vunpack.c.l.b16 %v603
        %v714 = vunpack.c.l.b16 %v604
        %v715 = vunpack.c.l.b16 %v605
        %v716 = vunpack.c.l.b16 %v606
        %v717 = vunpack.c.l.b16 %v607
        %v718 = vunpack.c.l.b16 %v608
        %v719 = vunpack.c.l.b16 %v609
        %v720 = vunpack.c.l.b16 %v610
        %v721 = vunpack.c.l.b16 %v611
        %v722 = vunpack.c.l.b16 %v612
        %v723 = vpack.c.b16 %v708, %v707
        %v724 = vpack.c.b16 %v710, %v709
        %v725 = vpack.c.b16 %v712, %v711
        %v726 = vpack.c.b16 %v714, %v713
        %v727 = vpack.c.b16 %v716, %v715
        %v728 = vpack.c.b16 %v718, %v717
        %v729 = vpack.c.b16 %v720, %v719
        %v730 = vpack.c.b16 %v722, %v721
        %739 = vmatpush.bf16.msra.mxu0 %v730
        %740 = vmatpush.bf16.msra.mxu0 %v729
        %741 = vmatpush.bf16.msra.mxu0 %v728
        %742 = vmatpush.bf16.msra.mxu0 %v727
        %743 = vmatpush.bf16.msra.mxu0 %v726
        %744 = vmatpush.bf16.msra.mxu0 %v725
        %745 = vmatpush.bf16.msra.mxu0 %v724
        %746 = vmatpush.bf16.msra.mxu0 %v723
        %747 = vmatmul.bf16.gmra.mxu0 %v653
        %v748 = vpop.f32.mrf.mxu0
        %v749 = vadd.f32 0.0, %v748
        %v750 = vpop.f32.mrf.mxu0
        %v751 = vadd.f32 0.0, %v750
        %752 = vmatmul.bf16.gmra.mxu0 %v661
        %v753 = vpop.f32.mrf.mxu0
        %v754 = vadd.f32 0.0, %v753
        %v755 = vpop.f32.mrf.mxu0
        %v756 = vadd.f32 0.0, %v755
        %757 = vmatmul.bf16.gmra.mxu0 %v669
        %v758 = vpop.f32.mrf.mxu0
        %v759 = vadd.f32 0.0, %v758
        %v760 = vpop.f32.mrf.mxu0
        %v761 = vadd.f32 0.0, %v760
        %762 = vmatmul.bf16.gmra.mxu0 %v677
        %v763 = vpop.f32.mrf.mxu0
        %v764 = vadd.f32 0.0, %v763
        %v765 = vpop.f32.mrf.mxu0
        %v766 = vadd.f32 0.0, %v765
        %767 = vmatmul.bf16.gmra.mxu0 %v685
        %v768 = vpop.f32.mrf.mxu0
        %v769 = vadd.f32 0.0, %v768
        %v770 = vpop.f32.mrf.mxu0
        %v771 = vadd.f32 0.0, %v770
        %772 = vdwg.mxu0
        %v794 = vunpack.c.l.b16 %v579
        %v795 = vunpack.c.l.b16 %v580
        %v796 = vunpack.c.l.b16 %v581
        %v797 = vunpack.c.l.b16 %v582
        %v798 = vunpack.c.l.b16 %v583
        %v799 = vunpack.c.l.b16 %v584
        %v800 = vunpack.c.l.b16 %v585
        %v801 = vunpack.c.l.b16 %v586
        %v802 = vunpack.c.l.b16 %v587
        %v803 = vunpack.c.l.b16 %v588
        %v804 = vunpack.c.l.b16 %v589
        %v805 = vunpack.c.l.b16 %v590
        %v806 = vunpack.c.l.b16 %v591
        %v807 = vunpack.c.l.b16 %v592
        %v808 = vunpack.c.l.b16 %v593
        %v809 = vunpack.c.l.b16 %v594
        %v810 = vpack.c.b16 %v795, %v794
        %v811 = vpack.c.b16 %v797, %v796
        %v812 = vpack.c.b16 %v799, %v798
        %v813 = vpack.c.b16 %v801, %v800
        %v814 = vpack.c.b16 %v803, %v802
        %v815 = vpack.c.b16 %v805, %v804
        %v816 = vpack.c.b16 %v807, %v806
        %v817 = vpack.c.b16 %v809, %v808
        %826 = vmatpush.bf16.msra.mxu0 %v817
        %827 = vmatpush.bf16.msra.mxu0 %v816
        %828 = vmatpush.bf16.msra.mxu0 %v815
        %829 = vmatpush.bf16.msra.mxu0 %v814
        %830 = vmatpush.bf16.msra.mxu0 %v813
        %831 = vmatpush.bf16.msra.mxu0 %v812
        %832 = vmatpush.bf16.msra.mxu0 %v811
        %833 = vmatpush.bf16.msra.mxu0 %v810
        %834 = vmatmul.bf16.gmra.mxu0 %v635
        %v835 = vpop.f32.mrf.mxu0
        %v836 = vadd.f32 %v749, %v835
        %v837 = vpop.f32.mrf.mxu0
        %v838 = vadd.f32 %v751, %v837
        %839 = vmatmul.bf16.gmra.mxu0 %v636
        %v840 = vpop.f32.mrf.mxu0
        %v841 = vadd.f32 %v754, %v840
        %v842 = vpop.f32.mrf.mxu0
        %v843 = vadd.f32 %v756, %v842
        %844 = vmatmul.bf16.gmra.mxu0 %v637
        %v845 = vpop.f32.mrf.mxu0
        %v846 = vadd.f32 %v759, %v845
        %v847 = vpop.f32.mrf.mxu0
        %v848 = vadd.f32 %v761, %v847
        %849 = vmatmul.bf16.gmra.mxu0 %v638
        %v850 = vpop.f32.mrf.mxu0
        %v851 = vadd.f32 %v764, %v850
        %v852 = vpop.f32.mrf.mxu0
        %v853 = vadd.f32 %v766, %v852
        %854 = vmatmul.bf16.gmra.mxu0 %v639
        %v855 = vpop.f32.mrf.mxu0
        %v856 = vadd.f32 %v769, %v855
        %v857 = vpop.f32.mrf.mxu0
        %v858 = vadd.f32 %v771, %v857
        %859 = vdwg.mxu0
        %v860 = vld [vmem:[#allocation2] sm:$0xe]
        %s861 = scalar_lea.vmem [#allocation3], 128
        %v862 = vld [vmem:[%s861] sm:$0xf]
        %v863 = vld [vmem:[%s861 + $0x4] sm:$0xf]
        %v864 = vld [vmem:[%s861 + $0x8] sm:$0xf]
        %v865 = vld [vmem:[%s861 + $0xc] sm:$0xf]
        %v866 = vld [vmem:[%s861 + $0x10] sm:$0xf]
        %v867 = vld [vmem:[%s861 + $0x14] sm:$0xf]
        %v868 = vld [vmem:[%s861 + $0x18] sm:$0xf]
        %v869 = vld [vmem:[%s861 + $0x1c] sm:$0xf]
        %v870 = vld [vmem:[%s861 + $0x20] sm:$0xf]
        %v871 = vld [vmem:[%s861 + $0x24] sm:$0xf]
        %v872 = vld [vmem:[%s861 + $0x28] sm:$0xf]
        %v873 = vld [vmem:[%s861 + $0x2c] sm:$0xf]
        %v874 = vld [vmem:[%s861 + $0x30] sm:$0xf]
        %v875 = vld [vmem:[%s861 + $0x34] sm:$0xf]
        %v876 = vld [vmem:[%s861 + $0x38] sm:$0xf]
        %v877 = vld [vmem:[%s861 + $0x3c] sm:$0xf]
        %v879 = vunpack.c.l.b16 %v860
        %v880 = vpack.c.b16 %v625, %v879
        %vm881 = vcmask 1046528
        %v882 = vrot.slane %v880, 1
        %v883 = vrot.slane %v636, 1
        %v884 = vsel %vm881, %v882, %v883
        %v885 = vrot.slane %v637, 1
        %v886 = vsel %vm881, %v883, %v885
        %v887 = vrot.slane %v638, 1
        %v888 = vsel %vm881, %v885, %v887
        %v889 = vrot.slane %v639, 1
        %v890 = vsel %vm881, %v887, %v889
        %v891 = vrot.slane %v640, 1
        %v892 = vsel %vm881, %v889, %v891
        %v914 = vunpack.c.l.b16 %v862
        %v915 = vunpack.c.l.b16 %v863
        %v916 = vunpack.c.l.b16 %v864
        %v917 = vunpack.c.l.b16 %v865
        %v918 = vunpack.c.l.b16 %v866
        %v919 = vunpack.c.l.b16 %v867
        %v920 = vunpack.c.l.b16 %v868
        %v921 = vunpack.c.l.b16 %v869
        %v922 = vunpack.c.l.b16 %v870
        %v923 = vunpack.c.l.b16 %v871
        %v924 = vunpack.c.l.b16 %v872
        %v925 = vunpack.c.l.b16 %v873
        %v926 = vunpack.c.l.b16 %v874
        %v927 = vunpack.c.l.b16 %v875
        %v928 = vunpack.c.l.b16 %v876
        %v929 = vunpack.c.l.b16 %v877
        %v930 = vpack.c.b16 %v915, %v914
        %v931 = vpack.c.b16 %v917, %v916
        %v932 = vpack.c.b16 %v919, %v918
        %v933 = vpack.c.b16 %v921, %v920
        %v934 = vpack.c.b16 %v923, %v922
        %v935 = vpack.c.b16 %v925, %v924
        %v936 = vpack.c.b16 %v927, %v926
        %v937 = vpack.c.b16 %v929, %v928
        %946 = vmatpush.bf16.msra.mxu0 %v937
        %947 = vmatpush.bf16.msra.mxu0 %v936
        %948 = vmatpush.bf16.msra.mxu0 %v935
        %949 = vmatpush.bf16.msra.mxu0 %v934
        %950 = vmatpush.bf16.msra.mxu0 %v933
        %951 = vmatpush.bf16.msra.mxu0 %v932
        %952 = vmatpush.bf16.msra.mxu0 %v931
        %953 = vmatpush.bf16.msra.mxu0 %v930
        %954 = vmatmul.bf16.gmra.mxu0 %v884
        %v955 = vpop.f32.mrf.mxu0
        %v956 = vadd.f32 0.0, %v955
        %v957 = vpop.f32.mrf.mxu0
        %v958 = vadd.f32 0.0, %v957
        %959 = vmatmul.bf16.gmra.mxu0 %v886
        %v960 = vpop.f32.mrf.mxu0
        %v961 = vadd.f32 0.0, %v960
        %v962 = vpop.f32.mrf.mxu0
        %v963 = vadd.f32 0.0, %v962
        %964 = vmatmul.bf16.gmra.mxu0 %v888
        %v965 = vpop.f32.mrf.mxu0
        %v966 = vadd.f32 0.0, %v965
        %v967 = vpop.f32.mrf.mxu0
        %v968 = vadd.f32 0.0, %v967
        %969 = vmatmul.bf16.gmra.mxu0 %v890
        %v970 = vpop.f32.mrf.mxu0
        %v971 = vadd.f32 0.0, %v970
        %v972 = vpop.f32.mrf.mxu0
        %v973 = vadd.f32 0.0, %v972
        %974 = vmatmul.bf16.gmra.mxu0 %v892
        %v975 = vpop.f32.mrf.mxu0
        %v976 = vadd.f32 0.0, %v975
        %v977 = vpop.f32.mrf.mxu0
        %v978 = vadd.f32 0.0, %v977
        %979 = vdwg.mxu0
        %v980 = vadd.f32 %v836, %v956
        %v981 = vadd.f32 %v838, %v958
        %v982 = vadd.f32 %v841, %v961
        %v983 = vadd.f32 %v843, %v963
        %v984 = vadd.f32 %v846, %v966
        %v985 = vadd.f32 %v848, %v968
        %v986 = vadd.f32 %v851, %v971
        %v987 = vadd.f32 %v853, %v973
        %v988 = vadd.f32 %v856, %v976
        %v989 = vadd.f32 %v858, %v978
        %v990 = vld [vmem:[#allocation2 + $0x4] sm:$0xe]
        %v991 = vld [vmem:[#allocation2 + $0x8] sm:$0xf]
        %v992 = vld [vmem:[#allocation2 + $0xc] sm:$0xf]
        %v993 = vld [vmem:[#allocation2 + $0x10] sm:$0xf]
        %v994 = vld [vmem:[#allocation2 + $0x14] sm:$0xf]
        %v995 = vld [vmem:[#allocation2 + $0x18] sm:$0xf]
        %v996 = vld [vmem:[#allocation2 + $0x1c] sm:$0xf]
        %v997 = vld [vmem:[#allocation2 + $0x20] sm:$0xf]
        %v998 = vld [vmem:[#allocation2 + $0x24] sm:$0xf]
        %v999 = vld [vmem:[#allocation2 + $0x28] sm:$0xf]
        %v1000 = vld [vmem:[#allocation2 + $0x2c] sm:$0x1]
        %s1001 = scalar_lea.vmem [#allocation3], 192
        %v1002 = vld [vmem:[%s1001] sm:$0xf]
        %v1003 = vld [vmem:[%s1001 + $0x4] sm:$0xf]
        %v1004 = vld [vmem:[%s1001 + $0x8] sm:$0xf]
        %v1005 = vld [vmem:[%s1001 + $0xc] sm:$0xf]
        %v1006 = vld [vmem:[%s1001 + $0x10] sm:$0xf]
        %v1007 = vld [vmem:[%s1001 + $0x14] sm:$0xf]
        %v1008 = vld [vmem:[%s1001 + $0x18] sm:$0xf]
        %v1009 = vld [vmem:[%s1001 + $0x1c] sm:$0xf]
        %v1010 = vld [vmem:[%s1001 + $0x20] sm:$0xf]
        %v1011 = vld [vmem:[%s1001 + $0x24] sm:$0xf]
        %v1012 = vld [vmem:[%s1001 + $0x28] sm:$0xf]
        %v1013 = vld [vmem:[%s1001 + $0x2c] sm:$0xf]
        %v1014 = vld [vmem:[%s1001 + $0x30] sm:$0xf]
        %v1015 = vld [vmem:[%s1001 + $0x34] sm:$0xf]
        %v1016 = vld [vmem:[%s1001 + $0x38] sm:$0xf]
        %v1017 = vld [vmem:[%s1001 + $0x3c] sm:$0xf]
        %v1029 = vunpack.c.l.b16 %v990
        %v1030 = vunpack.c.l.b16 %v991
        %v1031 = vunpack.c.l.b16 %v992
        %v1032 = vunpack.c.l.b16 %v993
        %v1033 = vunpack.c.l.b16 %v994
        %v1034 = vunpack.c.l.b16 %v995
        %v1035 = vunpack.c.l.b16 %v996
        %v1036 = vunpack.c.l.b16 %v997
        %v1037 = vunpack.c.l.b16 %v998
        %v1038 = vunpack.c.l.b16 %v999
        %v1039 = vunpack.c.l.b16 %v1000
        %v1040 = vpack.c.b16 %v1030, %v1029
        %v1041 = vpack.c.b16 %v1032, %v1031
        %v1042 = vpack.c.b16 %v1034, %v1033
        %v1043 = vpack.c.b16 %v1036, %v1035
        %v1044 = vpack.c.b16 %v1038, %v1037
        %v1045 = vpack.c.b16 %v1039, %v1039
        %v1046 = vrot.slane %v1040, 1
        %v1047 = vrot.slane %v1041, 1
        %v1048 = vsel %vm881, %v1046, %v1047
        %v1049 = vrot.slane %v1042, 1
        %v1050 = vsel %vm881, %v1047, %v1049
        %v1051 = vrot.slane %v1043, 1
        %v1052 = vsel %vm881, %v1049, %v1051
        %v1053 = vrot.slane %v1044, 1
        %v1054 = vsel %vm881, %v1051, %v1053
        %v1055 = vrot.slane %v1045, 1
        %v1056 = vsel %vm881, %v1053, %v1055
        %v1078 = vunpack.c.l.b16 %v1002
        %v1079 = vunpack.c.l.b16 %v1003
        %v1080 = vunpack.c.l.b16 %v1004
        %v1081 = vunpack.c.l.b16 %v1005
        %v1082 = vunpack.c.l.b16 %v1006
        %v1083 = vunpack.c.l.b16 %v1007
        %v1084 = vunpack.c.l.b16 %v1008
        %v1085 = vunpack.c.l.b16 %v1009
        %v1086 = vunpack.c.l.b16 %v1010
        %v1087 = vunpack.c.l.b16 %v1011
        %v1088 = vunpack.c.l.b16 %v1012
        %v1089 = vunpack.c.l.b16 %v1013
        %v1090 = vunpack.c.l.b16 %v1014
        %v1091 = vunpack.c.l.b16 %v1015
        %v1092 = vunpack.c.l.b16 %v1016
        %v1093 = vunpack.c.l.b16 %v1017
        %v1094 = vpack.c.b16 %v1079, %v1078
        %v1095 = vpack.c.b16 %v1081, %v1080
        %v1096 = vpack.c.b16 %v1083, %v1082
        %v1097 = vpack.c.b16 %v1085, %v1084
        %v1098 = vpack.c.b16 %v1087, %v1086
        %v1099 = vpack.c.b16 %v1089, %v1088
        %v1100 = vpack.c.b16 %v1091, %v1090
        %v1101 = vpack.c.b16 %v1093, %v1092
        %1110 = vmatpush.bf16.msra.mxu0 %v1101
        %1111 = vmatpush.bf16.msra.mxu0 %v1100
        %1112 = vmatpush.bf16.msra.mxu0 %v1099
        %1113 = vmatpush.bf16.msra.mxu0 %v1098
        %1114 = vmatpush.bf16.msra.mxu0 %v1097
        %1115 = vmatpush.bf16.msra.mxu0 %v1096
        %1116 = vmatpush.bf16.msra.mxu0 %v1095
        %1117 = vmatpush.bf16.msra.mxu0 %v1094
        %1118 = vmatmul.bf16.gmra.mxu0 %v1048
        %v1119 = vpop.f32.mrf.mxu0
        %v1120 = vadd.f32 0.0, %v1119
        %v1121 = vpop.f32.mrf.mxu0
        %v1122 = vadd.f32 0.0, %v1121
        %1123 = vmatmul.bf16.gmra.mxu0 %v1050
        %v1124 = vpop.f32.mrf.mxu0
        %v1125 = vadd.f32 0.0, %v1124
        %v1126 = vpop.f32.mrf.mxu0
        %v1127 = vadd.f32 0.0, %v1126
        %1128 = vmatmul.bf16.gmra.mxu0 %v1052
        %v1129 = vpop.f32.mrf.mxu0
        %v1130 = vadd.f32 0.0, %v1129
        %v1131 = vpop.f32.mrf.mxu0
        %v1132 = vadd.f32 0.0, %v1131
        %1133 = vmatmul.bf16.gmra.mxu0 %v1054
        %v1134 = vpop.f32.mrf.mxu0
        %v1135 = vadd.f32 0.0, %v1134
        %v1136 = vpop.f32.mrf.mxu0
        %v1137 = vadd.f32 0.0, %v1136
        %1138 = vmatmul.bf16.gmra.mxu0 %v1056
        %v1139 = vpop.f32.mrf.mxu0
        %v1140 = vadd.f32 0.0, %v1139
        %v1141 = vpop.f32.mrf.mxu0
        %v1142 = vadd.f32 0.0, %v1141
        %1143 = vdwg.mxu0
        %v1144 = vadd.f32 %v980, %v1120
        %v1145 = vadd.f32 %v981, %v1122
        %v1146 = vadd.f32 %v982, %v1125
        %v1147 = vadd.f32 %v983, %v1127
        %v1148 = vadd.f32 %v984, %v1130
        %v1149 = vadd.f32 %v985, %v1132
        %v1150 = vadd.f32 %v986, %v1135
        %v1151 = vadd.f32 %v987, %v1137
        %v1152 = vadd.f32 %v988, %v1140
        %v1153 = vadd.f32 %v989, %v1142
        %v1154 = vld [vmem:[#allocation2 + $0x2c] sm:$0x3]
        %s1155 = scalar_lea.vmem [#allocation3], 256
        %v1156 = vld [vmem:[%s1155] sm:$0xf]
        %v1157 = vld [vmem:[%s1155 + $0x4] sm:$0xf]
        %v1158 = vld [vmem:[%s1155 + $0x8] sm:$0xf]
        %v1159 = vld [vmem:[%s1155 + $0xc] sm:$0xf]
        %v1160 = vld [vmem:[%s1155 + $0x10] sm:$0xf]
        %v1161 = vld [vmem:[%s1155 + $0x14] sm:$0xf]
        %v1162 = vld [vmem:[%s1155 + $0x18] sm:$0xf]
        %v1163 = vld [vmem:[%s1155 + $0x1c] sm:$0xf]
        %v1164 = vld [vmem:[%s1155 + $0x20] sm:$0xf]
        %v1165 = vld [vmem:[%s1155 + $0x24] sm:$0xf]
        %v1166 = vld [vmem:[%s1155 + $0x28] sm:$0xf]
        %v1167 = vld [vmem:[%s1155 + $0x2c] sm:$0xf]
        %v1168 = vld [vmem:[%s1155 + $0x30] sm:$0xf]
        %v1169 = vld [vmem:[%s1155 + $0x34] sm:$0xf]
        %v1170 = vld [vmem:[%s1155 + $0x38] sm:$0xf]
        %v1171 = vld [vmem:[%s1155 + $0x3c] sm:$0xf]
        %v1173 = vunpack.c.l.b16 %v1154
        %v1174 = vpack.c.b16 %v1173, %v1173
        %vm1175 = vsmask.f32 6400
        %v1177 = vshrl.u32 %v1040, 16
        %v1179 = vrot.slane %v1177, 1
        %v1180 = vshll.u32 %v1040, 16
        %v1182 = vrot.slane %v1180, 2
        %v1183 = vor.u32 %v1179, %v1182
        %v1185 = vshrl.u32 %v1041, 16
        %v1187 = vrot.slane %v1185, 1
        %v1188 = vshll.u32 %v1041, 16
        %v1190 = vrot.slane %v1188, 2
        %v1191 = vor.u32 %v1187, %v1190
        %v1192 = vsel %vm1175, %v1183, %v1191
        %v1194 = vshrl.u32 %v1042, 16
        %v1196 = vrot.slane %v1194, 1
        %v1197 = vshll.u32 %v1042, 16
        %v1199 = vrot.slane %v1197, 2
        %v1200 = vor.u32 %v1196, %v1199
        %v1201 = vsel %vm1175, %v1191, %v1200
        %v1203 = vshrl.u32 %v1043, 16
        %v1205 = vrot.slane %v1203, 1
        %v1206 = vshll.u32 %v1043, 16
        %v1208 = vrot.slane %v1206, 2
        %v1209 = vor.u32 %v1205, %v1208
        %v1210 = vsel %vm1175, %v1200, %v1209
        %v1212 = vshrl.u32 %v1044, 16
        %v1214 = vrot.slane %v1212, 1
        %v1215 = vshll.u32 %v1044, 16
        %v1217 = vrot.slane %v1215, 2
        %v1218 = vor.u32 %v1214, %v1217
        %v1219 = vsel %vm1175, %v1209, %v1218
        %v1221 = vshrl.u32 %v1174, 16
        %v1223 = vrot.slane %v1221, 1
        %v1224 = vshll.u32 %v1174, 16
        %v1226 = vrot.slane %v1224, 2
        %v1227 = vor.u32 %v1223, %v1226
        %v1228 = vsel %vm1175, %v1218, %v1227
        %v1250 = vunpack.c.l.b16 %v1156
        %v1251 = vunpack.c.l.b16 %v1157
        %v1252 = vunpack.c.l.b16 %v1158
        %v1253 = vunpack.c.l.b16 %v1159
        %v1254 = vunpack.c.l.b16 %v1160
        %v1255 = vunpack.c.l.b16 %v1161
        %v1256 = vunpack.c.l.b16 %v1162
        %v1257 = vunpack.c.l.b16 %v1163
        %v1258 = vunpack.c.l.b16 %v1164
        %v1259 = vunpack.c.l.b16 %v1165
        %v1260 = vunpack.c.l.b16 %v1166
        %v1261 = vunpack.c.l.b16 %v1167
        %v1262 = vunpack.c.l.b16 %v1168
        %v1263 = vunpack.c.l.b16 %v1169
        %v1264 = vunpack.c.l.b16 %v1170
        %v1265 = vunpack.c.l.b16 %v1171
        %v1266 = vpack.c.b16 %v1251, %v1250
        %v1267 = vpack.c.b16 %v1253, %v1252
        %v1268 = vpack.c.b16 %v1255, %v1254
        %v1269 = vpack.c.b16 %v1257, %v1256
        %v1270 = vpack.c.b16 %v1259, %v1258
        %v1271 = vpack.c.b16 %v1261, %v1260
        %v1272 = vpack.c.b16 %v1263, %v1262
        %v1273 = vpack.c.b16 %v1265, %v1264
        %1282 = vmatpush.bf16.msra.mxu0 %v1273
        %1283 = vmatpush.bf16.msra.mxu0 %v1272
        %1284 = vmatpush.bf16.msra.mxu0 %v1271
        %1285 = vmatpush.bf16.msra.mxu0 %v1270
        %1286 = vmatpush.bf16.msra.mxu0 %v1269
        %1287 = vmatpush.bf16.msra.mxu0 %v1268
        %1288 = vmatpush.bf16.msra.mxu0 %v1267
        %1289 = vmatpush.bf16.msra.mxu0 %v1266
        %1290 = vmatmul.bf16.gmra.mxu0 %v1192
        %v1291 = vpop.f32.mrf.mxu0
        %v1292 = vadd.f32 0.0, %v1291
        %v1293 = vpop.f32.mrf.mxu0
        %v1294 = vadd.f32 0.0, %v1293
        %1295 = vmatmul.bf16.gmra.mxu0 %v1201
        %v1296 = vpop.f32.mrf.mxu0
        %v1297 = vadd.f32 0.0, %v1296
        %v1298 = vpop.f32.mrf.mxu0
        %v1299 = vadd.f32 0.0, %v1298
        %1300 = vmatmul.bf16.gmra.mxu0 %v1210
        %v1301 = vpop.f32.mrf.mxu0
        %v1302 = vadd.f32 0.0, %v1301
        %v1303 = vpop.f32.mrf.mxu0
        %v1304 = vadd.f32 0.0, %v1303
        %1305 = vmatmul.bf16.gmra.mxu0 %v1219
        %v1306 = vpop.f32.mrf.mxu0
        %v1307 = vadd.f32 0.0, %v1306
        %v1308 = vpop.f32.mrf.mxu0
        %v1309 = vadd.f32 0.0, %v1308
        %1310 = vmatmul.bf16.gmra.mxu0 %v1228
        %v1311 = vpop.f32.mrf.mxu0
        %v1312 = vadd.f32 0.0, %v1311
        %v1313 = vpop.f32.mrf.mxu0
        %v1314 = vadd.f32 0.0, %v1313
        %1315 = vdwg.mxu0
        %v1316 = vadd.f32 %v1144, %v1292
        %v1317 = vadd.f32 %v1145, %v1294
        %v1318 = vadd.f32 %v1146, %v1297
        %v1319 = vadd.f32 %v1147, %v1299
        %v1320 = vadd.f32 %v1148, %v1302
        %v1321 = vadd.f32 %v1149, %v1304
        %v1322 = vadd.f32 %v1150, %v1307
        %v1323 = vadd.f32 %v1151, %v1309
        %v1324 = vadd.f32 %v1152, %v1312
        %v1325 = vadd.f32 %v1153, %v1314
        %v1326 = vld [vmem:[#allocation2 + $0x4] sm:$0xc]
        %s1327 = scalar_lea.vmem [#allocation3], 320
        %v1328 = vld [vmem:[%s1327] sm:$0xf]
        %v1329 = vld [vmem:[%s1327 + $0x4] sm:$0xf]
        %v1330 = vld [vmem:[%s1327 + $0x8] sm:$0xf]
        %v1331 = vld [vmem:[%s1327 + $0xc] sm:$0xf]
        %v1332 = vld [vmem:[%s1327 + $0x10] sm:$0xf]
        %v1333 = vld [vmem:[%s1327 + $0x14] sm:$0xf]
        %v1334 = vld [vmem:[%s1327 + $0x18] sm:$0xf]
        %v1335 = vld [vmem:[%s1327 + $0x1c] sm:$0xf]
        %v1336 = vld [vmem:[%s1327 + $0x20] sm:$0xf]
        %v1337 = vld [vmem:[%s1327 + $0x24] sm:$0xf]
        %v1338 = vld [vmem:[%s1327 + $0x28] sm:$0xf]
        %v1339 = vld [vmem:[%s1327 + $0x2c] sm:$0xf]
        %v1340 = vld [vmem:[%s1327 + $0x30] sm:$0xf]
        %v1341 = vld [vmem:[%s1327 + $0x34] sm:$0xf]
        %v1342 = vld [vmem:[%s1327 + $0x38] sm:$0xf]
        %v1343 = vld [vmem:[%s1327 + $0x3c] sm:$0xf]
        %v1345 = vunpack.c.l.b16 %v1326
        %v1346 = vpack.c.b16 %v1030, %v1345
        %vm1347 = vcmask 1045504
        %v1348 = vrot.slane %v1346, 2
        %v1349 = vrot.slane %v1041, 2
        %v1350 = vsel %vm1347, %v1348, %v1349
        %v1351 = vrot.slane %v1042, 2
        %v1352 = vsel %vm1347, %v1349, %v1351
        %v1353 = vrot.slane %v1043, 2
        %v1354 = vsel %vm1347, %v1351, %v1353
        %v1355 = vrot.slane %v1044, 2
        %v1356 = vsel %vm1347, %v1353, %v1355
        %v1357 = vrot.slane %v1174, 2
        %v1358 = vsel %vm1347, %v1355, %v1357
        %v1380 = vunpack.c.l.b16 %v1328
        %v1381 = vunpack.c.l.b16 %v1329
        %v1382 = vunpack.c.l.b16 %v1330
        %v1383 = vunpack.c.l.b16 %v1331
        %v1384 = vunpack.c.l.b16 %v1332
        %v1385 = vunpack.c.l.b16 %v1333
        %v1386 = vunpack.c.l.b16 %v1334
        %v1387 = vunpack.c.l.b16 %v1335
        %v1388 = vunpack.c.l.b16 %v1336
        %v1389 = vunpack.c.l.b16 %v1337
        %v1390 = vunpack.c.l.b16 %v1338
        %v1391 = vunpack.c.l.b16 %v1339
        %v1392 = vunpack.c.l.b16 %v1340
        %v1393 = vunpack.c.l.b16 %v1341
        %v1394 = vunpack.c.l.b16 %v1342
        %v1395 = vunpack.c.l.b16 %v1343
        %v1396 = vpack.c.b16 %v1381, %v1380
        %v1397 = vpack.c.b16 %v1383, %v1382
        %v1398 = vpack.c.b16 %v1385, %v1384
        %v1399 = vpack.c.b16 %v1387, %v1386
        %v1400 = vpack.c.b16 %v1389, %v1388
        %v1401 = vpack.c.b16 %v1391, %v1390
        %v1402 = vpack.c.b16 %v1393, %v1392
        %v1403 = vpack.c.b16 %v1395, %v1394
        %1412 = vmatpush.bf16.msra.mxu0 %v1403
        %1413 = vmatpush.bf16.msra.mxu0 %v1402
        %1414 = vmatpush.bf16.msra.mxu0 %v1401
        %1415 = vmatpush.bf16.msra.mxu0 %v1400
        %1416 = vmatpush.bf16.msra.mxu0 %v1399
        %1417 = vmatpush.bf16.msra.mxu0 %v1398
        %1418 = vmatpush.bf16.msra.mxu0 %v1397
        %1419 = vmatpush.bf16.msra.mxu0 %v1396
        %1420 = vmatmul.bf16.gmra.mxu0 %v1350
        %v1421 = vpop.f32.mrf.mxu0
        %v1422 = vadd.f32 0.0, %v1421
        %v1423 = vpop.f32.mrf.mxu0
        %v1424 = vadd.f32 0.0, %v1423
        %1425 = vmatmul.bf16.gmra.mxu0 %v1352
        %v1426 = vpop.f32.mrf.mxu0
        %v1427 = vadd.f32 0.0, %v1426
        %v1428 = vpop.f32.mrf.mxu0
        %v1429 = vadd.f32 0.0, %v1428
        %1430 = vmatmul.bf16.gmra.mxu0 %v1354
        %v1431 = vpop.f32.mrf.mxu0
        %v1432 = vadd.f32 0.0, %v1431
        %v1433 = vpop.f32.mrf.mxu0
        %v1434 = vadd.f32 0.0, %v1433
        %1435 = vmatmul.bf16.gmra.mxu0 %v1356
        %v1436 = vpop.f32.mrf.mxu0
        %v1437 = vadd.f32 0.0, %v1436
        %v1438 = vpop.f32.mrf.mxu0
        %v1439 = vadd.f32 0.0, %v1438
        %1440 = vmatmul.bf16.gmra.mxu0 %v1358
        %v1441 = vpop.f32.mrf.mxu0
        %v1442 = vadd.f32 0.0, %v1441
        %v1443 = vpop.f32.mrf.mxu0
        %v1444 = vadd.f32 0.0, %v1443
        %1445 = vdwg.mxu0
        %v1446 = vadd.f32 %v1316, %v1422
        %v1447 = vadd.f32 %v1317, %v1424
        %v1448 = vadd.f32 %v1318, %v1427
        %v1449 = vadd.f32 %v1319, %v1429
        %v1450 = vadd.f32 %v1320, %v1432
        %v1451 = vadd.f32 %v1321, %v1434
        %v1452 = vadd.f32 %v1322, %v1437
        %v1453 = vadd.f32 %v1323, %v1439
        %v1454 = vadd.f32 %v1324, %v1442
        %v1455 = vadd.f32 %v1325, %v1444
        %v1456 = vld [vmem:[#allocation2 + $0x8] sm:$0xc]
        %v1457 = vld [vmem:[#allocation2 + $0xc] sm:$0xf]
        %v1458 = vld [vmem:[#allocation2 + $0x10] sm:$0xf]
        %v1459 = vld [vmem:[#allocation2 + $0x14] sm:$0xf]
        %v1460 = vld [vmem:[#allocation2 + $0x18] sm:$0xf]
        %v1461 = vld [vmem:[#allocation2 + $0x1c] sm:$0xf]
        %v1462 = vld [vmem:[#allocation2 + $0x20] sm:$0xf]
        %v1463 = vld [vmem:[#allocation2 + $0x24] sm:$0xf]
        %v1464 = vld [vmem:[#allocation2 + $0x28] sm:$0xf]
        %v1465 = vld [vmem:[#allocation2 + $0x2c] sm:$0xf]
        %v1466 = vld [vmem:[#allocation2 + $0x30] sm:$0x3]
        %s1467 = scalar_lea.vmem [#allocation3], 384
        %v1468 = vld [vmem:[%s1467] sm:$0xf]
        %v1469 = vld [vmem:[%s1467 + $0x4] sm:$0xf]
        %v1470 = vld [vmem:[%s1467 + $0x8] sm:$0xf]
        %v1471 = vld [vmem:[%s1467 + $0xc] sm:$0xf]
        %v1472 = vld [vmem:[%s1467 + $0x10] sm:$0xf]
        %v1473 = vld [vmem:[%s1467 + $0x14] sm:$0xf]
        %v1474 = vld [vmem:[%s1467 + $0x18] sm:$0xf]
        %v1475 = vld [vmem:[%s1467 + $0x1c] sm:$0xf]
        %v1476 = vld [vmem:[%s1467 + $0x20] sm:$0xf]
        %v1477 = vld [vmem:[%s1467 + $0x24] sm:$0xf]
        %v1478 = vld [vmem:[%s1467 + $0x28] sm:$0xf]
        %v1479 = vld [vmem:[%s1467 + $0x2c] sm:$0xf]
        %v1480 = vld [vmem:[%s1467 + $0x30] sm:$0xf]
        %v1481 = vld [vmem:[%s1467 + $0x34] sm:$0xf]
        %v1482 = vld [vmem:[%s1467 + $0x38] sm:$0xf]
        %v1483 = vld [vmem:[%s1467 + $0x3c] sm:$0xf]
        %v1495 = vunpack.c.l.b16 %v1456
        %v1496 = vunpack.c.l.b16 %v1457
        %v1497 = vunpack.c.l.b16 %v1458
        %v1498 = vunpack.c.l.b16 %v1459
        %v1499 = vunpack.c.l.b16 %v1460
        %v1500 = vunpack.c.l.b16 %v1461
        %v1501 = vunpack.c.l.b16 %v1462
        %v1502 = vunpack.c.l.b16 %v1463
        %v1503 = vunpack.c.l.b16 %v1464
        %v1504 = vunpack.c.l.b16 %v1465
        %v1505 = vunpack.c.l.b16 %v1466
        %v1506 = vpack.c.b16 %v1496, %v1495
        %v1507 = vpack.c.b16 %v1498, %v1497
        %v1508 = vpack.c.b16 %v1500, %v1499
        %v1509 = vpack.c.b16 %v1502, %v1501
        %v1510 = vpack.c.b16 %v1504, %v1503
        %v1511 = vpack.c.b16 %v1505, %v1505
        %v1512 = vrot.slane %v1506, 2
        %v1513 = vrot.slane %v1507, 2
        %v1514 = vsel %vm1347, %v1512, %v1513
        %v1515 = vrot.slane %v1508, 2
        %v1516 = vsel %vm1347, %v1513, %v1515
        %v1517 = vrot.slane %v1509, 2
        %v1518 = vsel %vm1347, %v1515, %v1517
        %v1519 = vrot.slane %v1510, 2
        %v1520 = vsel %vm1347, %v1517, %v1519
        %v1521 = vrot.slane %v1511, 2
        %v1522 = vsel %vm1347, %v1519, %v1521
        %v1544 = vunpack.c.l.b16 %v1468
        %v1545 = vunpack.c.l.b16 %v1469
        %v1546 = vunpack.c.l.b16 %v1470
        %v1547 = vunpack.c.l.b16 %v1471
        %v1548 = vunpack.c.l.b16 %v1472
        %v1549 = vunpack.c.l.b16 %v1473
        %v1550 = vunpack.c.l.b16 %v1474
        %v1551 = vunpack.c.l.b16 %v1475
        %v1552 = vunpack.c.l.b16 %v1476
        %v1553 = vunpack.c.l.b16 %v1477
        %v1554 = vunpack.c.l.b16 %v1478
        %v1555 = vunpack.c.l.b16 %v1479
        %v1556 = vunpack.c.l.b16 %v1480
        %v1557 = vunpack.c.l.b16 %v1481
        %v1558 = vunpack.c.l.b16 %v1482
        %v1559 = vunpack.c.l.b16 %v1483
        %v1560 = vpack.c.b16 %v1545, %v1544
        %v1561 = vpack.c.b16 %v1547, %v1546
        %v1562 = vpack.c.b16 %v1549, %v1548
        %v1563 = vpack.c.b16 %v1551, %v1550
        %v1564 = vpack.c.b16 %v1553, %v1552
        %v1565 = vpack.c.b16 %v1555, %v1554
        %v1566 = vpack.c.b16 %v1557, %v1556
        %v1567 = vpack.c.b16 %v1559, %v1558
        %1576 = vmatpush.bf16.msra.mxu0 %v1567
        %1577 = vmatpush.bf16.msra.mxu0 %v1566
        %1578 = vmatpush.bf16.msra.mxu0 %v1565
        %1579 = vmatpush.bf16.msra.mxu0 %v1564
        %1580 = vmatpush.bf16.msra.mxu0 %v1563
        %1581 = vmatpush.bf16.msra.mxu0 %v1562
        %1582 = vmatpush.bf16.msra.mxu0 %v1561
        %1583 = vmatpush.bf16.msra.mxu0 %v1560
        %1584 = vmatmul.bf16.gmra.mxu0 %v1514
        %v1585 = vpop.f32.mrf.mxu0
        %v1586 = vadd.f32 0.0, %v1585
        %v1587 = vpop.f32.mrf.mxu0
        %v1588 = vadd.f32 0.0, %v1587
        %1589 = vmatmul.bf16.gmra.mxu0 %v1516
        %v1590 = vpop.f32.mrf.mxu0
        %v1591 = vadd.f32 0.0, %v1590
        %v1592 = vpop.f32.mrf.mxu0
        %v1593 = vadd.f32 0.0, %v1592
        %1594 = vmatmul.bf16.gmra.mxu0 %v1518
        %v1595 = vpop.f32.mrf.mxu0
        %v1596 = vadd.f32 0.0, %v1595
        %v1597 = vpop.f32.mrf.mxu0
        %v1598 = vadd.f32 0.0, %v1597
        %1599 = vmatmul.bf16.gmra.mxu0 %v1520
        %v1600 = vpop.f32.mrf.mxu0
        %v1601 = vadd.f32 0.0, %v1600
        %v1602 = vpop.f32.mrf.mxu0
        %v1603 = vadd.f32 0.0, %v1602
        %1604 = vmatmul.bf16.gmra.mxu0 %v1522
        %v1605 = vpop.f32.mrf.mxu0
        %v1606 = vadd.f32 0.0, %v1605
        %v1607 = vpop.f32.mrf.mxu0
        %v1608 = vadd.f32 0.0, %v1607
        %1609 = vdwg.mxu0
        %v1610 = vadd.f32 %v1446, %v1586
        %v1611 = vadd.f32 %v1447, %v1588
        %v1612 = vadd.f32 %v1448, %v1591
        %v1613 = vadd.f32 %v1449, %v1593
        %v1614 = vadd.f32 %v1450, %v1596
        %v1615 = vadd.f32 %v1451, %v1598
        %v1616 = vadd.f32 %v1452, %v1601
        %v1617 = vadd.f32 %v1453, %v1603
        %v1618 = vadd.f32 %v1454, %v1606
        %v1619 = vadd.f32 %v1455, %v1608
        %v1620 = vld [vmem:[#allocation2 + $0x30] sm:$0x7]
        %s1621 = scalar_lea.vmem [#allocation3], 448
        %v1622 = vld [vmem:[%s1621] sm:$0xf]
        %v1623 = vld [vmem:[%s1621 + $0x4] sm:$0xf]
        %v1624 = vld [vmem:[%s1621 + $0x8] sm:$0xf]
        %v1625 = vld [vmem:[%s1621 + $0xc] sm:$0xf]
        %v1626 = vld [vmem:[%s1621 + $0x10] sm:$0xf]
        %v1627 = vld [vmem:[%s1621 + $0x14] sm:$0xf]
        %v1628 = vld [vmem:[%s1621 + $0x18] sm:$0xf]
        %v1629 = vld [vmem:[%s1621 + $0x1c] sm:$0xf]
        %v1630 = vld [vmem:[%s1621 + $0x20] sm:$0xf]
        %v1631 = vld [vmem:[%s1621 + $0x24] sm:$0xf]
        %v1632 = vld [vmem:[%s1621 + $0x28] sm:$0xf]
        %v1633 = vld [vmem:[%s1621 + $0x2c] sm:$0xf]
        %v1634 = vld [vmem:[%s1621 + $0x30] sm:$0xf]
        %v1635 = vld [vmem:[%s1621 + $0x34] sm:$0xf]
        %v1636 = vld [vmem:[%s1621 + $0x38] sm:$0xf]
        %v1637 = vld [vmem:[%s1621 + $0x3c] sm:$0xf]
        %v1639 = vunpack.c.l.b16 %v1620
        %v1640 = vpack.c.b16 %v1639, %v1639
        %vm1641 = vsmask.f32 5376
        %v1643 = vshrl.u32 %v1506, 16
        %v1645 = vrot.slane %v1643, 2
        %v1646 = vshll.u32 %v1506, 16
        %v1648 = vrot.slane %v1646, 3
        %v1649 = vor.u32 %v1645, %v1648
        %v1651 = vshrl.u32 %v1507, 16
        %v1653 = vrot.slane %v1651, 2
        %v1654 = vshll.u32 %v1507, 16
        %v1656 = vrot.slane %v1654, 3
        %v1657 = vor.u32 %v1653, %v1656
        %v1658 = vsel %vm1641, %v1649, %v1657
        %v1660 = vshrl.u32 %v1508, 16
        %v1662 = vrot.slane %v1660, 2
        %v1663 = vshll.u32 %v1508, 16
        %v1665 = vrot.slane %v1663, 3
        %v1666 = vor.u32 %v1662, %v1665
        %v1667 = vsel %vm1641, %v1657, %v1666
        %v1669 = vshrl.u32 %v1509, 16
        %v1671 = vrot.slane %v1669, 2
        %v1672 = vshll.u32 %v1509, 16
        %v1674 = vrot.slane %v1672, 3
        %v1675 = vor.u32 %v1671, %v1674
        %v1676 = vsel %vm1641, %v1666, %v1675
        %v1678 = vshrl.u32 %v1510, 16
        %v1680 = vrot.slane %v1678, 2
        %v1681 = vshll.u32 %v1510, 16
        %v1683 = vrot.slane %v1681, 3
        %v1684 = vor.u32 %v1680, %v1683
        %v1685 = vsel %vm1641, %v1675, %v1684
        %v1687 = vshrl.u32 %v1640, 16
        %v1689 = vrot.slane %v1687, 2
        %v1690 = vshll.u32 %v1640, 16
        %v1692 = vrot.slane %v1690, 3
        %v1693 = vor.u32 %v1689, %v1692
        %v1694 = vsel %vm1641, %v1684, %v1693
        %v1716 = vunpack.c.l.b16 %v1622
        %v1717 = vunpack.c.l.b16 %v1623
        %v1718 = vunpack.c.l.b16 %v1624
        %v1719 = vunpack.c.l.b16 %v1625
        %v1720 = vunpack.c.l.b16 %v1626
        %v1721 = vunpack.c.l.b16 %v1627
        %v1722 = vunpack.c.l.b16 %v1628
        %v1723 = vunpack.c.l.b16 %v1629
        %v1724 = vunpack.c.l.b16 %v1630
        %v1725 = vunpack.c.l.b16 %v1631
        %v1726 = vunpack.c.l.b16 %v1632
        %v1727 = vunpack.c.l.b16 %v1633
        %v1728 = vunpack.c.l.b16 %v1634
        %v1729 = vunpack.c.l.b16 %v1635
        %v1730 = vunpack.c.l.b16 %v1636
        %v1731 = vunpack.c.l.b16 %v1637
        %v1732 = vpack.c.b16 %v1717, %v1716
        %v1733 = vpack.c.b16 %v1719, %v1718
        %v1734 = vpack.c.b16 %v1721, %v1720
        %v1735 = vpack.c.b16 %v1723, %v1722
        %v1736 = vpack.c.b16 %v1725, %v1724
        %v1737 = vpack.c.b16 %v1727, %v1726
        %v1738 = vpack.c.b16 %v1729, %v1728
        %v1739 = vpack.c.b16 %v1731, %v1730
        %1748 = vmatpush.bf16.msra.mxu0 %v1739
        %1749 = vmatpush.bf16.msra.mxu0 %v1738
        %1750 = vmatpush.bf16.msra.mxu0 %v1737
        %1751 = vmatpush.bf16.msra.mxu0 %v1736
        %1752 = vmatpush.bf16.msra.mxu0 %v1735
        %1753 = vmatpush.bf16.msra.mxu0 %v1734
        %1754 = vmatpush.bf16.msra.mxu0 %v1733
        %1755 = vmatpush.bf16.msra.mxu0 %v1732
        %1756 = vmatmul.bf16.gmra.mxu0 %v1658
        %v1757 = vpop.f32.mrf.mxu0
        %v1758 = vadd.f32 0.0, %v1757
        %v1759 = vpop.f32.mrf.mxu0
        %v1760 = vadd.f32 0.0, %v1759
        %1761 = vmatmul.bf16.gmra.mxu0 %v1667
        %v1762 = vpop.f32.mrf.mxu0
        %v1763 = vadd.f32 0.0, %v1762
        %v1764 = vpop.f32.mrf.mxu0
        %v1765 = vadd.f32 0.0, %v1764
        %1766 = vmatmul.bf16.gmra.mxu0 %v1676
        %v1767 = vpop.f32.mrf.mxu0
        %v1768 = vadd.f32 0.0, %v1767
        %v1769 = vpop.f32.mrf.mxu0
        %v1770 = vadd.f32 0.0, %v1769
        %1771 = vmatmul.bf16.gmra.mxu0 %v1685
        %v1772 = vpop.f32.mrf.mxu0
        %v1773 = vadd.f32 0.0, %v1772
        %v1774 = vpop.f32.mrf.mxu0
        %v1775 = vadd.f32 0.0, %v1774
        %1776 = vmatmul.bf16.gmra.mxu0 %v1694
        %v1777 = vpop.f32.mrf.mxu0
        %v1778 = vadd.f32 0.0, %v1777
        %v1779 = vpop.f32.mrf.mxu0
        %v1780 = vadd.f32 0.0, %v1779
        %1781 = vdwg.mxu0
        %v1782 = vadd.f32 %v1610, %v1758
        %v1783 = vadd.f32 %v1611, %v1760
        %v1784 = vadd.f32 %v1612, %v1763
        %v1785 = vadd.f32 %v1613, %v1765
        %v1786 = vadd.f32 %v1614, %v1768
        %v1787 = vadd.f32 %v1615, %v1770
        %v1788 = vadd.f32 %v1616, %v1773
        %v1789 = vadd.f32 %v1617, %v1775
        %v1790 = vadd.f32 %v1618, %v1778
        %v1791 = vadd.f32 %v1619, %v1780
        %v1792 = vld [vmem:[#allocation2 + $0x8] sm:$0x8]
        %s1793 = scalar_lea.vmem [#allocation3], 512
        %v1794 = vld [vmem:[%s1793] sm:$0xf]
        %v1795 = vld [vmem:[%s1793 + $0x4] sm:$0xf]
        %v1796 = vld [vmem:[%s1793 + $0x8] sm:$0xf]
        %v1797 = vld [vmem:[%s1793 + $0xc] sm:$0xf]
        %v1798 = vld [vmem:[%s1793 + $0x10] sm:$0xf]
        %v1799 = vld [vmem:[%s1793 + $0x14] sm:$0xf]
        %v1800 = vld [vmem:[%s1793 + $0x18] sm:$0xf]
        %v1801 = vld [vmem:[%s1793 + $0x1c] sm:$0xf]
        %v1802 = vld [vmem:[%s1793 + $0x20] sm:$0xf]
        %v1803 = vld [vmem:[%s1793 + $0x24] sm:$0xf]
        %v1804 = vld [vmem:[%s1793 + $0x28] sm:$0xf]
        %v1805 = vld [vmem:[%s1793 + $0x2c] sm:$0xf]
        %v1806 = vld [vmem:[%s1793 + $0x30] sm:$0xf]
        %v1807 = vld [vmem:[%s1793 + $0x34] sm:$0xf]
        %v1808 = vld [vmem:[%s1793 + $0x38] sm:$0xf]
        %v1809 = vld [vmem:[%s1793 + $0x3c] sm:$0xf]
        %v1811 = vunpack.c.l.b16 %v1792
        %v1812 = vpack.c.b16 %v1496, %v1811
        %vm1813 = vcmask 1044480
        %v1814 = vrot.slane %v1812, 3
        %v1815 = vrot.slane %v1507, 3
        %v1816 = vsel %vm1813, %v1814, %v1815
        %v1817 = vrot.slane %v1508, 3
        %v1818 = vsel %vm1813, %v1815, %v1817
        %v1819 = vrot.slane %v1509, 3
        %v1820 = vsel %vm1813, %v1817, %v1819
        %v1821 = vrot.slane %v1510, 3
        %v1822 = vsel %vm1813, %v1819, %v1821
        %v1823 = vrot.slane %v1640, 3
        %v1824 = vsel %vm1813, %v1821, %v1823
        %v1846 = vunpack.c.l.b16 %v1794
        %v1847 = vunpack.c.l.b16 %v1795
        %v1848 = vunpack.c.l.b16 %v1796
        %v1849 = vunpack.c.l.b16 %v1797
        %v1850 = vunpack.c.l.b16 %v1798
        %v1851 = vunpack.c.l.b16 %v1799
        %v1852 = vunpack.c.l.b16 %v1800
        %v1853 = vunpack.c.l.b16 %v1801
        %v1854 = vunpack.c.l.b16 %v1802
        %v1855 = vunpack.c.l.b16 %v1803
        %v1856 = vunpack.c.l.b16 %v1804
        %v1857 = vunpack.c.l.b16 %v1805
        %v1858 = vunpack.c.l.b16 %v1806
        %v1859 = vunpack.c.l.b16 %v1807
        %v1860 = vunpack.c.l.b16 %v1808
        %v1861 = vunpack.c.l.b16 %v1809
        %v1862 = vpack.c.b16 %v1847, %v1846
        %v1863 = vpack.c.b16 %v1849, %v1848
        %v1864 = vpack.c.b16 %v1851, %v1850
        %v1865 = vpack.c.b16 %v1853, %v1852
        %v1866 = vpack.c.b16 %v1855, %v1854
        %v1867 = vpack.c.b16 %v1857, %v1856
        %v1868 = vpack.c.b16 %v1859, %v1858
        %v1869 = vpack.c.b16 %v1861, %v1860
        %1878 = vmatpush.bf16.msra.mxu0 %v1869
        %1879 = vmatpush.bf16.msra.mxu0 %v1868
        %1880 = vmatpush.bf16.msra.mxu0 %v1867
        %1881 = vmatpush.bf16.msra.mxu0 %v1866
        %1882 = vmatpush.bf16.msra.mxu0 %v1865
        %1883 = vmatpush.bf16.msra.mxu0 %v1864
        %1884 = vmatpush.bf16.msra.mxu0 %v1863
        %1885 = vmatpush.bf16.msra.mxu0 %v1862
        %1886 = vmatmul.bf16.gmra.mxu0 %v1816
        %v1887 = vpop.f32.mrf.mxu0
        %v1888 = vadd.f32 0.0, %v1887
        %v1889 = vpop.f32.mrf.mxu0
        %v1890 = vadd.f32 0.0, %v1889
        %1891 = vmatmul.bf16.gmra.mxu0 %v1818
        %v1892 = vpop.f32.mrf.mxu0
        %v1893 = vadd.f32 0.0, %v1892
        %v1894 = vpop.f32.mrf.mxu0
        %v1895 = vadd.f32 0.0, %v1894
        %1896 = vmatmul.bf16.gmra.mxu0 %v1820
        %v1897 = vpop.f32.mrf.mxu0
        %v1898 = vadd.f32 0.0, %v1897
        %v1899 = vpop.f32.mrf.mxu0
        %v1900 = vadd.f32 0.0, %v1899
        %1901 = vmatmul.bf16.gmra.mxu0 %v1822
        %v1902 = vpop.f32.mrf.mxu0
        %v1903 = vadd.f32 0.0, %v1902
        %v1904 = vpop.f32.mrf.mxu0
        %v1905 = vadd.f32 0.0, %v1904
        %1906 = vmatmul.bf16.gmra.mxu0 %v1824
        %v1907 = vpop.f32.mrf.mxu0
        %v1908 = vadd.f32 0.0, %v1907
        %v1909 = vpop.f32.mrf.mxu0
        %v1910 = vadd.f32 0.0, %v1909
        %1911 = vdwg.mxu0
        %v1912 = vadd.f32 %v1782, %v1888
        %v1913 = vadd.f32 %v1783, %v1890
        %v1914 = vadd.f32 %v1784, %v1893
        %v1915 = vadd.f32 %v1785, %v1895
        %v1916 = vadd.f32 %v1786, %v1898
        %v1917 = vadd.f32 %v1787, %v1900
        %v1918 = vadd.f32 %v1788, %v1903
        %v1919 = vadd.f32 %v1789, %v1905
        %v1920 = vadd.f32 %v1790, %v1908
        %v1921 = vadd.f32 %v1791, %v1910
        %v1922 = vld [vmem:[%s293 + $0x4] sm:$0xe]
        %v1923 = vld [vmem:[%s293 + $0x8] sm:$0xf]
        %v1924 = vld [vmem:[%s293 + $0xc] sm:$0xf]
        %v1925 = vld [vmem:[%s293 + $0x10] sm:$0xf]
        %v1926 = vld [vmem:[%s293 + $0x14] sm:$0xf]
        %v1927 = vld [vmem:[%s293 + $0x18] sm:$0xf]
        %v1928 = vld [vmem:[%s293 + $0x1c] sm:$0xf]
        %v1929 = vld [vmem:[%s293 + $0x20] sm:$0xf]
        %v1930 = vld [vmem:[%s293 + $0x24] sm:$0xf]
        %v1931 = vld [vmem:[%s293 + $0x28] sm:$0xf]
        %v1932 = vld [vmem:[%s293 + $0x2c] sm:$0x3]
        %v1933 = vld [vmem:[%s3] sm:$0xf]
        %v1934 = vld [vmem:[%s3 + $0x4] sm:$0xf]
        %v1935 = vld [vmem:[%s3 + $0x8] sm:$0xf]
        %v1936 = vld [vmem:[%s3 + $0xc] sm:$0xf]
        %v1937 = vld [vmem:[%s3 + $0x10] sm:$0x3]
        %v1949 = vunpack.c.l.b16 %v1922
        %v1950 = vunpack.c.l.b16 %v1923
        %v1951 = vunpack.c.l.b16 %v1924
        %v1952 = vunpack.c.l.b16 %v1925
        %v1953 = vunpack.c.l.b16 %v1926
        %v1954 = vunpack.c.l.b16 %v1927
        %v1955 = vunpack.c.l.b16 %v1928
        %v1956 = vunpack.c.l.b16 %v1929
        %v1957 = vunpack.c.l.b16 %v1930
        %v1958 = vunpack.c.l.b16 %v1931
        %v1959 = vunpack.c.l.b16 %v1932
        %v1960 = vpack.c.b16 %v1950, %v1949
        %v1961 = vpack.c.b16 %v1952, %v1951
        %v1962 = vpack.c.b16 %v1954, %v1953
        %v1963 = vpack.c.b16 %v1956, %v1955
        %v1964 = vpack.c.b16 %v1958, %v1957
        %v1965 = vpack.c.b16 %v1959, %v1959
        %v1967 = vshrl.u32 %v1960, 16
        %v1969 = vrot.slane %v1967, 1
        %v1970 = vshll.u32 %v1960, 16
        %v1972 = vrot.slane %v1970, 2
        %v1973 = vor.u32 %v1969, %v1972
        %v1975 = vshrl.u32 %v1961, 16
        %v1977 = vrot.slane %v1975, 1
        %v1978 = vshll.u32 %v1961, 16
        %v1980 = vrot.slane %v1978, 2
        %v1981 = vor.u32 %v1977, %v1980
        %v1982 = vsel %vm1175, %v1973, %v1981
        %v1984 = vshrl.u32 %v1962, 16
        %v1986 = vrot.slane %v1984, 1
        %v1987 = vshll.u32 %v1962, 16
        %v1989 = vrot.slane %v1987, 2
        %v1990 = vor.u32 %v1986, %v1989
        %v1991 = vsel %vm1175, %v1981, %v1990
        %v1993 = vshrl.u32 %v1963, 16
        %v1995 = vrot.slane %v1993, 1
        %v1996 = vshll.u32 %v1963, 16
        %v1998 = vrot.slane %v1996, 2
        %v1999 = vor.u32 %v1995, %v1998
        %v2000 = vsel %vm1175, %v1990, %v1999
        %v2002 = vshrl.u32 %v1964, 16
        %v2004 = vrot.slane %v2002, 1
        %v2005 = vshll.u32 %v1964, 16
        %v2007 = vrot.slane %v2005, 2
        %v2008 = vor.u32 %v2004, %v2007
        %v2009 = vsel %vm1175, %v1999, %v2008
        %v2011 = vshrl.u32 %v1965, 16
        %v2013 = vrot.slane %v2011, 1
        %v2014 = vshll.u32 %v1965, 16
        %v2016 = vrot.slane %v2014, 2
        %v2017 = vor.u32 %v2013, %v2016
        %v2018 = vsel %vm1175, %v2008, %v2017
        %v2024 = vunpack.c.l.b16 %v1933
        %v2025 = vunpack.c.l.b16 %v1934
        %v2026 = vunpack.c.l.b16 %v1935
        %v2027 = vunpack.c.l.b16 %v1936
        %v2028 = vunpack.c.l.b16 %v1937
        %v2029 = vpack.c.b16 %v2025, %v2024
        %v2030 = vpack.c.b16 %v2027, %v2026
        %v2031 = vpack.c.b16 %v2028, %v2028
        %v2035 = vsel %vm370, %v1982, 0
        %v2038 = vsel %vm370, %v1991, 0
        %v2041 = vsel %vm370, %v2000, 0
        %v2044 = vsel %vm370, %v2009, 0
        %v2047 = vsel %vm370, %v2018, 0
        %v2050 = vsel %vm392, %v2031, 0
        %2052 = vmatpush.bf16.msra.mxu0 0
        %2053 = vmatpush.bf16.msra.mxu0 0
        %2054 = vmatpush.bf16.msra.mxu0 0
        %2055 = vmatpush.bf16.msra.mxu0 0
        %2056 = vmatpush.bf16.msra.mxu0 0
        %2057 = vmatpush.bf16.msra.mxu0 %v2050
        %2058 = vmatpush.bf16.msra.mxu0 %v2030
        %2059 = vmatpush.bf16.msra.mxu0 %v2029
        %2060 = vmatmul.bf16.gmra.mxu0 %v2035
        %v2061 = vpop.f32.mrf.mxu0
        %v2062 = vadd.f32 0.0, %v2061
        %v2063 = vpop.f32.mrf.mxu0
        %v2064 = vadd.f32 0.0, %v2063
        %2065 = vmatmul.bf16.gmra.mxu0 %v2038
        %v2066 = vpop.f32.mrf.mxu0
        %v2067 = vadd.f32 0.0, %v2066
        %v2068 = vpop.f32.mrf.mxu0
        %v2069 = vadd.f32 0.0, %v2068
        %2070 = vmatmul.bf16.gmra.mxu0 %v2041
        %v2071 = vpop.f32.mrf.mxu0
        %v2072 = vadd.f32 0.0, %v2071
        %v2073 = vpop.f32.mrf.mxu0
        %v2074 = vadd.f32 0.0, %v2073
        %2075 = vmatmul.bf16.gmra.mxu0 %v2044
        %v2076 = vpop.f32.mrf.mxu0
        %v2077 = vadd.f32 0.0, %v2076
        %v2078 = vpop.f32.mrf.mxu0
        %v2079 = vadd.f32 0.0, %v2078
        %2080 = vmatmul.bf16.gmra.mxu0 %v2047
        %v2081 = vpop.f32.mrf.mxu0
        %v2082 = vadd.f32 0.0, %v2081
        %v2083 = vpop.f32.mrf.mxu0
        %v2084 = vadd.f32 0.0, %v2083
        %2085 = vdwg.mxu0
        %v2086 = vadd.f32 %v1912, %v2062
        %v2087 = vadd.f32 %v1913, %v2064
        %v2088 = vadd.f32 %v1914, %v2067
        %v2089 = vadd.f32 %v1915, %v2069
        %v2090 = vadd.f32 %v1916, %v2072
        %v2091 = vadd.f32 %v1917, %v2074
        %v2092 = vadd.f32 %v1918, %v2077
        %v2093 = vadd.f32 %v1919, %v2079
        %v2094 = vadd.f32 %v1920, %v2082
        %v2095 = vadd.f32 %v1921, %v2084
        %v2096 = vld [vmem:[%s5] sm:$0x1]
        %v2098 = vperm.slane %v2096, 0
        %v2100 = vadd.f32 %v2086, %v2098
        %v2101 = vadd.f32 %v2087, %v2098
        %v2102 = vadd.f32 %v2088, %v2098
        %v2103 = vadd.f32 %v2089, %v2098
        %v2104 = vadd.f32 %v2090, %v2098
        %v2105 = vadd.f32 %v2091, %v2098
        %v2106 = vadd.f32 %v2092, %v2098
        %v2107 = vadd.f32 %v2093, %v2098
        %v2108 = vadd.f32 %v2094, %v2098
        %v2109 = vadd.f32 %v2095, %v2098
        %v2110 = vmax.f32 %v2100, 0.0
        %v2111 = vmax.f32 %v2101, 0.0
        %v2112 = vmax.f32 %v2102, 0.0
        %v2113 = vmax.f32 %v2103, 0.0
        %v2114 = vmax.f32 %v2104, 0.0
        %v2115 = vmax.f32 %v2105, 0.0
        %v2116 = vmax.f32 %v2106, 0.0
        %v2117 = vmax.f32 %v2107, 0.0
        %v2118 = vmax.f32 %v2108, 0.0
        %v2119 = vmax.f32 %v2109, 0.0
        %2120 = vst [vmem:[%s288] sm:$0xff] %v2110
        %2121 = vst [vmem:[%s288 + $0x8] sm:$0xff] %v2111
        %2122 = vst [vmem:[%s288 + $0x10] sm:$0xff] %v2112
        %2123 = vst [vmem:[%s288 + $0x18] sm:$0xff] %v2113
        %2124 = vst [vmem:[%s288 + $0x20] sm:$0xff] %v2114
        %2125 = vst [vmem:[%s288 + $0x28] sm:$0xff] %v2115
        %2126 = vst [vmem:[%s288 + $0x30] sm:$0xff] %v2116
        %2127 = vst [vmem:[%s288 + $0x38] sm:$0xff] %v2117
        %2128 = vst [vmem:[%s288 + $0x40] sm:$0xff] %v2118
        %2129 = vst [vmem:[%s288 + $0x48] sm:$0xff] %v2119
        %s2130 = sand.u32 %s182, 1
        %s2131 = scalar_lea.sflag [#allocation5], %s2130
        %s2132 = sand.u32 %s182, 1
        %s2133 = smul.addr %s2132, 80
        %s2134 = scalar_lea.vmem [#allocation6], %s2133
        // Predicated region
        $region57: #{tpu_custom_call.1} parent=47 // pred_check
          %p2135 = pneg %p192
        $region58: #{tpu_custom_call.1} parent=47 // pred_check_branch
          %2137 = sbr.rel (%p2135) target = $region60
        $region59: #{tpu_custom_call.1} parent=47 // pred_region
          %2139 = vsyncadd %s2131, 0
          %s2140 = smul.addr %s22, 10
          %s2141 = smul.addr %s2140, 8
          %s2142 = scalar_lea.hbm %s7, %s2141
          %s2143 = sshll.u32 %s2134, 4
          %s2144 = int_to_ptr.vmem [resolvable:$true] %s2143
          %s2145 = sshll.u32 %s2142, 4
          %s2146 = int_to_ptr.hbm [resolvable:$true] %s2145
          %2151 = dma.vmem_to_hbm [thread:$0]  %s2144, 1280, %s2146, %s2131, 128, 128, 8
        $region60: #{tpu_custom_call.1} parent=47 // pred_fallthru
          _
      $region48: #{tpu_custom_call.1} parent=5 // pred_fallthru
        _
      %p2152 = scmp.le.s32.totalorder 2, %s17
      // Predicated region
      $region61: #{tpu_custom_call.1} parent=5 // pred_check
        %p2153 = pneg %p2152
      $region62: #{tpu_custom_call.1} parent=5 // pred_check_branch
        %2155 = sbr.rel (%p2153) target = $region64
      $region63: #{tpu_custom_call.1} parent=5 // pred_region
        %s2156 = ssub.s32 %s17, 2
        // Predicated region
        $region65: #{tpu_custom_call.1} parent=63 // pred_check
          %p2157 = pneg %p198
        $region66: #{tpu_custom_call.1} parent=63 // pred_check_branch
          %2159 = sbr.rel (%p2157) target = $region68
        $region67: #{tpu_custom_call.1} parent=63 // pred_region
          %s2160 = sand.u32 %s183, 1
          %s2161 = scalar_lea.sflag [#allocation5], %s2160
          %s2162 = sand.u32 %s183, 1
          %s2163 = smul.addr %s2162, 80
          %s2164 = scalar_lea.vmem [#allocation6], %s2163
          %2166 = dma.done %s2161, 1280
        $region68: #{tpu_custom_call.1} parent=63 // pred_fallthru
          _
      $region64: #{tpu_custom_call.1} parent=5 // pred_fallthru
        _
    $region6: #{tpu_custom_call.1} parent=1 // loop_footer
      %s21 = sadd.s32 1, %s17
    $region7: #{tpu_custom_call.1} parent=1 // loop_footer_branch
      %16 = sbr.rel target = $region3
    $region8: #{tpu_custom_call.1} parent=1 // loop_exit
      _
    %2167 = vsyncpa [#allocation4], 1
    %s2168 = scalar_lea.sflag [#allocation4], 1
    %2169 = vsyncpa %s2168, 1
    %2170 = vsyncpa [#allocation5], 1
    %s2171 = scalar_lea.sflag [#allocation5], 1
    %2172 = vsyncpa %s2171, 1

</llo_original>
